<compile_context>
chip_gen: v7x
topology: tpu7x:2x2x1
jax: 0.10.0
libtpu: 0.0.40
codegen_flags: <defaults>
</compile_context>

<pallas_src>
import functools

import jax
import jax.numpy as jnp
from jax.experimental import pallas as pl
from jax.experimental.pallas import tpu as pltpu

_HI = jax.lax.Precision.HIGHEST   # explicit precision where numerics matter


# ============================= Pallas kernel ==============================

def _astgcn_block_kernel(x_ref, sat_ref, cheb_ref, mtheta_ref, mt_ref, mr_ref,
                         bias_ref, gamma_ref, beta_ref, lnsum_ref, lnbc_ref,
                         o_ref, *, K, eps):
    """Fused ASTGCN block (one batch element).

    x_ref     : (1, N, F_in*T)        graph signal, cols (fi, t)   [compute dtype]
    sat_ref   : (1, N, N)             spatial attention, pre-transposed
    cheb_ref  : (K, N, N)             Chebyshev polynomials, pre-transposed
    mtheta_ref: (K*F_in*T, T*F_chev)  block-diag Theta_k (x) I_T, cols (t, fc)
    mt_ref    : (T*F_chev, Ct)        banded 1x3 time-conv matrix, cols (ft, t')
    mr_ref    : (F_in*T, Ct)          strided 1x1 residual-conv matrix, cols (ft, t')
    bias/gamma/beta_ref : (1, Ct)     f32 rows, cols (ft, t')
    lnsum_ref : (Ct, T_out)           factored LN group-mean matrix (f32)
    lnbc_ref  : (T_out, Ct)           factored LN broadcast-back matrix (f32)
    o_ref     : (1, N, Ct)            LayerNorm output, cols (ft, t'), lane-dense
    """
    fit = x_ref.shape[2]                    # F_in * T
    xs = x_ref[0]                           # (N, F_in*T)
    st = sat_ref[0]                         # (N, N)
    mtheta = mtheta_ref[...]                # (K*F_in*T, T*F_chev)

    # --- K-order Chebyshev graph conv with spatial attention (f32 acc) -----
    #   g = relu( sum_k ((T_k o sAt)^T X) Theta_k )
    # accumulated with static row slices of mtheta (no lane concatenation).
    g = None
    for k in range(K):                      # K small & static -> unrolled
        a_k = cheb_ref[k] * st              # == (T_k o sAt)^T, no in-kernel transpose
        p_k = jnp.dot(a_k, xs, preferred_element_type=jnp.float32)
        p_k = p_k.astype(xs.dtype)          # keep MXU operands in compute dtype
        t_k = jnp.dot(p_k, mtheta[k * fit:(k + 1) * fit, :],
                      preferred_element_type=jnp.float32)
        g = t_k if g is None else g + t_k
    g = jnp.maximum(g, 0.0)                 # ReLU, (N, T*F_chev), f32

    # --- time conv (1x3, stride s) + residual conv (1x1, stride s) ---------
    z = jnp.dot(g.astype(mt_ref.dtype), mt_ref[...],
                preferred_element_type=jnp.float32)
    z = z + jnp.dot(xs, mr_ref[...], preferred_element_type=jnp.float32)
    z = jnp.maximum(z + bias_ref[...], 0.0)                 # (N, Ct), f32

    # --- LayerNorm over F_tf: factored moment matmuls, all in f32 ----------
    mu_g = jnp.dot(z, lnsum_ref[...], preferred_element_type=jnp.float32)
    e2_g = jnp.dot(z * z, lnsum_ref[...], preferred_element_type=jnp.float32)
    mu = jnp.dot(mu_g, lnbc_ref[...], preferred_element_type=jnp.float32)
    e2 = jnp.dot(e2_g, lnbc_ref[...], preferred_element_type=jnp.float32)
    inv = jax.lax.rsqrt(e2 - mu * mu + eps)
    o_ref[0] = ((z - mu) * inv * gamma_ref[...] + beta_ref[...]).astype(o_ref.dtype)


# ========================= attention (XLA glue) ===========================
# TODO(synk): attention score chains kept in plain JAX/XLA — tiny (T,T)/(N,N)
# vector contractions with no Pallas upside at these shapes.

def _temporal_attention(x, p, prec=_HI):
    lhs = jnp.einsum('bnft,n->btf', x, p['U1'], precision=prec)
    lhs = jnp.einsum('btf,fn->btn', lhs, p['U2'], precision=prec)
    rhs = jnp.einsum('f,bnft->bnt', p['U3'], x, precision=prec)
    prod = jnp.einsum('btn,bnu->btu', lhs, rhs, precision=prec)
    E = jnp.einsum('tu,buv->btv', p['Ve'], jax.nn.sigmoid(prod + p['be']),
                   precision=prec)
    return jax.nn.softmax(E, axis=1)


def _spatial_attention(x, p, prec=_HI):
    lhs = jnp.einsum('bnft,t->bnf', x, p['W1'], precision=prec)
    lhs = jnp.einsum('bnf,ft->bnt', lhs, p['W2'], precision=prec)
    rhs = jnp.einsum('f,bnft->bnt', p['W3'], x, precision=prec)
    prod = jnp.einsum('bnt,btm->bnm', lhs, jnp.swapaxes(rhs, -1, -2),
                      precision=prec)
    S = jnp.einsum('nm,bmj->bnj', p['Vs'], jax.nn.sigmoid(prod + p['bs']),
                   precision=prec)
    return jax.nn.softmax(S, axis=1)


# ================= precomputed constants (built once) =====================

def _build_block_constants(params, cheb_polys, time_strides, compute_dtype):
    K, F_in, F_chev = params['theta'].shape
    F_tf = params['W_time'].shape[0]
    N = cheb_polys.shape[-1]
    T = params['Ve'].shape[0]
    s = int(time_strides)
    T_out = (T - 1) // s + 1
    Ct = F_tf * T_out
    cd = compute_dtype
    f32 = jnp.float32

    # Pre-transposed Chebyshev polynomials (kernel forms a_k = T_k^T o sAt^T).
    cheb_t = jnp.swapaxes(cheb_polys, 1, 2).astype(cd)                   # (K,N,N)

    # Block-diag Theta_k (x) I_T: Mtheta[(k,fi,t),(t',fc)] = theta[k,fi,fc]·[t==t']
    eye_t = jnp.eye(T, dtype=f32)
    mtheta = (params['theta'][:, :, None, None, :] *
              eye_t[None, None, :, :, None]).reshape(K * F_in * T, T * F_chev)

    # Banded 1x3 time conv (output cols ordered (ft, t')):
    #   M_time[(t,fc),(ft,t')] = W_time[ft, fc, 0, t - s*t' + 1]  if 0 <= . <= 2
    t_idx = jnp.arange(T)[:, None]
    tp_idx = jnp.arange(T_out)[None, :]
    d = t_idx - s * tp_idx + 1                                           # (T,T_out)
    valid = (d >= 0) & (d <= 2)
    w_dfg = jnp.transpose(params['W_time'][:, :, 0, :], (2, 1, 0))       # (3,Fc,Ftf)
    m4 = jnp.where(valid[:, :, None, None], w_dfg[jnp.clip(d, 0, 2)], 0.0)
    m_time = jnp.transpose(m4, (0, 2, 3, 1)).reshape(T * F_chev, Ct)     # rows (t,fc)

    # Strided 1x1 residual conv: M_res[(fi,t),(ft,t')] = W_res[ft,fi]·[t==s*t']
    sel = (t_idx == s * tp_idx).astype(f32)                              # (T,T_out)
    w_fg = params['W_res'][:, :, 0, 0].T                                 # (F_in,Ftf)
    m_res = (w_fg[:, None, :, None] * sel[None, :, None, :]).reshape(F_in * T, Ct)

    # Per-column bias / LN affine rows (cols ordered (ft, t')).
    bias_row = jnp.repeat(params['b_time'] + params['b_res'], T_out).reshape(1, Ct)
    gamma_row = jnp.repeat(params['ln_gamma'], T_out).reshape(1, Ct)
    beta_row = jnp.repeat(params['ln_beta'], T_out).reshape(1, Ct)

    # Factored LayerNorm moment matrices: z @ ln_sum -> per-t' mean over F_tf,
    # @ ln_bcast broadcasts it back to every (ft, t') column (~F_tf x fewer MACs
    # than the dense (Ct, Ct) averaging matrix).
    ln_sum = jnp.tile(jnp.eye(T_out, dtype=f32), (F_tf, 1)) / F_tf       # (Ct,T_out)
    ln_bcast = jnp.tile(jnp.eye(T_out, dtype=f32), (1, F_tf))            # (T_out,Ct)

    return dict(
        cheb_t=cheb_t,
        mtheta=mtheta.astype(cd),
        m_time=m_time.astype(cd),
        m_res=m_res.astype(cd),
        bias_row=bias_row.astype(f32),
        gamma_row=gamma_row.astype(f32),
        beta_row=beta_row.astype(f32),
        ln_sum=ln_sum,
        ln_bcast=ln_bcast,
        dims=(K, F_in, F_chev, F_tf, N, T, T_out, Ct),
    )


# ============================== full block ================================

def make_astgcn_block(params, cheb_polys, time_strides=1,
                      compute_dtype=jnp.float32):
    """Returns forward(x): (B, N, F_in, T) -> (B, N, nb_time_filter, T_out).

    All derived constant operands are built once here (hoisted out of the
    per-call forward).  compute_dtype=bfloat16 feeds bf16 operands to every
    in-kernel MXU matmul while keeping f32 accumulation / LayerNorm math.
    """
    consts = _build_block_constants(params, cheb_polys, time_strides,
                                    compute_dtype)
    K, F_in, F_chev, F_tf, N, T, T_out, Ct = consts['dims']
    cd = compute_dtype

    def forward(x):
        B = x.shape[0]
        assert x.shape == (B, N, F_in, T), x.shape

        # ---- attention scores (XLA glue) ----
        t_at = _temporal_attention(x, params)                          # (B,T,T)
        x_tat = jnp.matmul(x.reshape(B, N * F_in, T), t_at,
                           precision=_HI).reshape(B, N, F_in, T)
        s_at = _spatial_attention(x_tat, params)                       # (B,N,N)

        x2 = x.reshape(B, N, F_in * T).astype(cd)    # free reshape, cols (fi,t)
        sat_t = jnp.swapaxes(s_at, 1, 2).astype(cd)  # (B,N,N), pre-transposed

        out = pl.pallas_call(
            functools.partial(_astgcn_block_kernel, K=K, eps=1e-5),
            out_shape=jax.ShapeDtypeStruct((B, N, Ct), jnp.float32),
            grid_spec=pltpu.PrefetchScalarGridSpec(
                num_scalar_prefetch=0,
                grid=(B,),
                in_specs=[
                    pl.BlockSpec((1, N, F_in * T), lambda b: (b, 0, 0)),
                    pl.BlockSpec((1, N, N), lambda b: (b, 0, 0)),
                    pl.BlockSpec((K, N, N), lambda b: (0, 0, 0)),
                    pl.BlockSpec((K * F_in * T, T * F_chev), lambda b: (0, 0)),
                    pl.BlockSpec((T * F_chev, Ct), lambda b: (0, 0)),
                    pl.BlockSpec((F_in * T, Ct), lambda b: (0, 0)),
                    pl.BlockSpec((1, Ct), lambda b: (0, 0)),
                    pl.BlockSpec((1, Ct), lambda b: (0, 0)),
                    pl.BlockSpec((1, Ct), lambda b: (0, 0)),
                    pl.BlockSpec((Ct, T_out), lambda b: (0, 0)),
                    pl.BlockSpec((T_out, Ct), lambda b: (0, 0)),
                ],
                out_specs=pl.BlockSpec((1, N, Ct), lambda b: (b, 0, 0)),
            ),
            compiler_params=pltpu.CompilerParams(
                dimension_semantics=("parallel",)),
        )(x2, sat_t, consts['cheb_t'], consts['mtheta'], consts['m_time'],
          consts['m_res'], consts['bias_row'], consts['gamma_row'],
          consts['beta_row'], consts['ln_sum'], consts['ln_bcast'])

        # Columns already ordered (ft, t') -> PyTorch layout via free reshape.
        return out.reshape(B, N, F_tf, T_out)

    return forward


# ============================ pure-JAX reference ===========================

def _reference_forward(x, p, cheb, time_strides):
    """Literal transcription of the PyTorch ASTGCN_block forward (f32/HIGHEST)."""
    hp = _HI
    B, N, F_in, T = x.shape
    K, _, F_chev = p['theta'].shape
    s = int(time_strides)
    T_out = (T - 1) // s + 1

    # Temporal attention + x_TAt
    lhs = jnp.einsum('bnft,n->btf', x, p['U1'], precision=hp)
    lhs = jnp.einsum('btf,fn->btn', lhs, p['U2'], precision=hp)
    rhs = jnp.einsum('f,bnft->bnt', p['U3'], x, precision=hp)
    prod = jnp.einsum('btn,bnu->btu', lhs, rhs, precision=hp)
    E = jnp.einsum('tu,buv->btv', p['Ve'], jax.nn.sigmoid(prod + p['be']),
                   precision=hp)
    E_norm = jax.nn.softmax(E, axis=1)
    x_tat = jnp.matmul(x.reshape(B, N * F_in, T), E_norm,
                       precision=hp).reshape(B, N, F_in, T)

    # Spatial attention (on x_TAt)
    lhs = jnp.einsum('bnft,t->bnf', x_tat, p['W1'], precision=hp)
    lhs = jnp.einsum('bnf,ft->bnt', lhs, p['W2'], precision=hp)
    rhs = jnp.einsum('f,bnft->bnt', p['W3'], x_tat, precision=hp)
    prod = jnp.einsum('bnt,btm->bnm', lhs, jnp.swapaxes(rhs, -1, -2),
                      precision=hp)
    S = jnp.einsum('nm,bmj->bnj', p['Vs'], jax.nn.sigmoid(prod + p['bs']),
                   precision=hp)
    s_at = jax.nn.softmax(S, axis=1)

    # cheb_conv_withSAt (literal time / k loops)
    outs = []
    for t in range(T):
        gs = x[:, :, :, t]
        o = jnp.zeros((B, N, F_chev), jnp.float32)
        for k in range(K):
            tk_at = cheb[k][None] * s_at
            r = jnp.einsum('bmn,bmf->bnf', tk_at, gs, precision=hp)
            o = o + jnp.einsum('bnf,fo->bno', r, p['theta'][k], precision=hp)
        outs.append(o[..., None])
    gcn = jax.nn.relu(jnp.concatenate(outs, axis=-1))                 # (B,N,Fc,T)

    # time conv (1x3, stride (1,s), pad (0,1))
    gp = jnp.pad(jnp.transpose(gcn, (0, 2, 1, 3)),
                 ((0, 0), (0, 0), (0, 0), (1, 1)))
    wt = p['W_time'][:, :, 0, :]
    tc = [jnp.einsum('bfnd,gfd->bgn', gp[..., s * i: s * i + 3], wt,
                     precision=hp) for i in range(T_out)]
    time_out = jnp.stack(tc, axis=-1) + p['b_time'][None, :, None, None]

    # residual conv (1x1, stride (1,s))
    xp = jnp.transpose(x, (0, 2, 1, 3))[..., ::s]
    res_out = (jnp.einsum('bfnt,gf->bgnt', xp, p['W_res'][:, :, 0, 0],
                          precision=hp)
               + p['b_res'][None, :, None, None])

    # relu + LayerNorm(F_tf) + output permutes
    z = jax.nn.relu(res_out + time_out)                               # (B,Ftf,N,To)
    zp = jnp.transpose(z, (0, 3, 2, 1))                               # (B,To,N,Ftf)
    mu = jnp.mean(zp, axis=-1, keepdims=True)
    var = jnp.mean((zp - mu) ** 2, axis=-1, keepdims=True)
    ln = (zp - mu) / jnp.sqrt(var + 1e-5) * p['ln_gamma'] + p['ln_beta']
    return jnp.transpose(ln, (0, 2, 3, 1))                            # (B,N,Ftf,To)


def _build_cheb_polynomials(key, N, K):
    a = jax.random.uniform(key, (N, N), dtype=jnp.float32)
    adj = (a + a.T) * 0.5
    adj = adj - jnp.diag(jnp.diag(adj))
    deg = jnp.sum(adj, axis=1)
    lap = jnp.diag(deg) - adj
    lam_max = 2.0 * jnp.max(deg)
    l_tilde = (2.0 / lam_max) * lap - jnp.eye(N, dtype=jnp.float32)
    polys = [jnp.eye(N, dtype=jnp.float32), l_tilde]
    for _ in range(2, K):
        polys.append(2.0 * l_tilde @ polys[-1] - polys[-2])
    return jnp.stack(polys[:K], axis=0)


if __name__ == "__main__":
    B, N, F_in, T = 2, 16, 4, 8
    K, F_chev, F_tf, time_strides = 3, 32, 32, 1

    key = jax.random.PRNGKey(0)
    ks = jax.random.split(key, 20)

    def rnd(i, shape, scale=0.1):
        return scale * jax.random.normal(ks[i], shape, dtype=jnp.float32)

    x = jax.random.normal(ks[0], (B, N, F_in, T), dtype=jnp.float32)
    cheb_polys = _build_cheb_polynomials(ks[1], N, K)

    params = dict(
        U1=rnd(2, (N,)), U2=rnd(3, (F_in, N)), U3=rnd(4, (F_in,)),
        be=rnd(5, (1, T, T)), Ve=rnd(6, (T, T)),
        W1=rnd(7, (T,)), W2=rnd(8, (F_in, T)), W3=rnd(9, (F_in,)),
        bs=rnd(10, (1, N, N)), Vs=rnd(11, (N, N)),
        theta=rnd(12, (K, F_in, F_chev)),
        W_time=rnd(13, (F_tf, F_chev, 1, 3)), b_time=rnd(14, (F_tf,)),
        W_res=rnd(15, (F_tf, F_in, 1, 1)), b_res=rnd(16, (F_tf,)),
        ln_gamma=1.0 + rnd(17, (F_tf,)), ln_beta=rnd(18, (F_tf,)),
    )

    # f32 path: constants built once, forward jitted.
    fwd = jax.jit(make_astgcn_block(params, cheb_polys, time_strides))
    out = jax.block_until_ready(fwd(x))

    ref = _reference_forward(x, params, cheb_polys, time_strides)
    T_out = (T - 1) // time_strides + 1
    assert out.shape == (B, N, F_tf, T_out), out.shape
    max_err = float(jnp.max(jnp.abs(out - ref)))
    assert jnp.allclose(out, ref, atol=2e-3, rtol=2e-3), max_err

    # bf16 MXU fast path (bf16 matmul operands, f32 accumulation and f32
    # LayerNorm math) — now tolerance-checked against the f32 reference.
    fwd_bf16 = jax.jit(make_astgcn_block(params, cheb_polys, time_strides,
                                         compute_dtype=jnp.bfloat16))
    out_bf16 = jax.block_until_ready(fwd_bf16(x))
    assert out_bf16.shape == out.shape
    assert bool(jnp.all(jnp.isfinite(out_bf16)))
    bf16_mean_err = float(jnp.mean(jnp.abs(out_bf16 - ref)))
    assert bf16_mean_err < 5e-2, bf16_mean_err   # loose: bf16 operand rounding

    print("KERNEL_OK")
</pallas_src>

<mosaic_0001>
module attributes {stable_mosaic.version = 11 : i64} {
  func.func @_astgcn_block_kernel(%arg0: i32, %arg1: memref<1x16x32xf32, #tpu.memory_space<vmem>>, %arg2: memref<1x16x16xf32, #tpu.memory_space<vmem>>, %arg3: memref<3x16x16xf32, #tpu.memory_space<vmem>>, %arg4: memref<96x256xf32, #tpu.memory_space<vmem>>, %arg5: memref<256x256xf32, #tpu.memory_space<vmem>>, %arg6: memref<32x256xf32, #tpu.memory_space<vmem>>, %arg7: memref<1x256xf32, #tpu.memory_space<vmem>>, %arg8: memref<1x256xf32, #tpu.memory_space<vmem>>, %arg9: memref<1x256xf32, #tpu.memory_space<vmem>>, %arg10: memref<256x8xf32, #tpu.memory_space<vmem>>, %arg11: memref<8x256xf32, #tpu.memory_space<vmem>>, %arg12: memref<1x16x256xf32, #tpu.memory_space<vmem>>) attributes {dimension_semantics = [#tpu.dimension_semantics<parallel>], iteration_bounds = array<i64: 2>, scalar_prefetch = 0 : i64, scratch_operands = 0 : i64, tpu.core_type = #tpu.core_type<tc>, window_params = [{transform_indices = @transform_0, window_bounds = array<i64: 1, 16, 32>}, {transform_indices = @transform_1, window_bounds = array<i64: 1, 16, 16>}, {pipeline_mode = #tpu.pipeline_mode<synchronous>, transform_indices = @transform_2, window_bounds = array<i64: 3, 16, 16>}, {pipeline_mode = #tpu.pipeline_mode<synchronous>, transform_indices = @transform_3, window_bounds = array<i64: 96, 256>}, {pipeline_mode = #tpu.pipeline_mode<synchronous>, transform_indices = @transform_4, window_bounds = array<i64: 256, 256>}, {pipeline_mode = #tpu.pipeline_mode<synchronous>, transform_indices = @transform_5, window_bounds = array<i64: 32, 256>}, {pipeline_mode = #tpu.pipeline_mode<synchronous>, transform_indices = @transform_6, window_bounds = array<i64: 1, 256>}, {pipeline_mode = #tpu.pipeline_mode<synchronous>, transform_indices = @transform_7, window_bounds = array<i64: 1, 256>}, {pipeline_mode = #tpu.pipeline_mode<synchronous>, transform_indices = @transform_8, window_bounds = array<i64: 1, 256>}, {pipeline_mode = #tpu.pipeline_mode<synchronous>, transform_indices = @transform_9, window_bounds = array<i64: 256, 8>}, {pipeline_mode = #tpu.pipeline_mode<synchronous>, transform_indices = @transform_10, window_bounds = array<i64: 8, 256>}, {transform_indices = @transform_11, window_bounds = array<i64: 1, 16, 256>}]} {
    %c0 = arith.constant 0 : index
    %c0_0 = arith.constant 0 : index
    %c0_1 = arith.constant 0 : index
    %0 = vector.load %arg1[%c0, %c0_0, %c0_1] : memref<1x16x32xf32, #tpu.memory_space<vmem>>, vector<1x16x32xf32>
    %1 = vector.shape_cast %0 : vector<1x16x32xf32> to vector<16x32xf32>
    %c0_2 = arith.constant 0 : index
    %c0_3 = arith.constant 0 : index
    %c0_4 = arith.constant 0 : index
    %2 = vector.load %arg2[%c0_2, %c0_3, %c0_4] : memref<1x16x16xf32, #tpu.memory_space<vmem>>, vector<1x16x16xf32>
    %3 = vector.shape_cast %2 : vector<1x16x16xf32> to vector<16x16xf32>
    %c0_5 = arith.constant 0 : index
    %c0_6 = arith.constant 0 : index
    %4 = vector.load %arg4[%c0_5, %c0_6] : memref<96x256xf32, #tpu.memory_space<vmem>>, vector<96x256xf32>
    %c0_7 = arith.constant 0 : index
    %c0_8 = arith.constant 0 : index
    %c0_9 = arith.constant 0 : index
    %5 = vector.load %arg3[%c0_7, %c0_8, %c0_9] : memref<3x16x16xf32, #tpu.memory_space<vmem>>, vector<1x16x16xf32>
    %6 = vector.shape_cast %5 : vector<1x16x16xf32> to vector<16x16xf32>
    %7 = arith.mulf %6, %3 : vector<16x16xf32>
    %cst = arith.constant dense<0.000000e+00> : vector<16x32xf32>
    %8 = tpu.matmul %7, %1, %cst {dimension_numbers = #tpu.dot_dimension_numbers<[1], [0], [0], [1], [0, 0, 1, 1], [], []>} : vector<16x16xf32>, vector<16x32xf32>, vector<16x32xf32> -> vector<16x32xf32>
    %9 = vector.extract_strided_slice %4 {offsets = [0, 0], sizes = [32, 256], strides = [1, 1]} : vector<96x256xf32> to vector<32x256xf32>
    %cst_10 = arith.constant dense<0.000000e+00> : vector<16x256xf32>
    %10 = tpu.matmul %8, %9, %cst_10 {dimension_numbers = #tpu.dot_dimension_numbers<[1], [0], [0], [1], [0, 0, 1, 1], [], []>} : vector<16x32xf32>, vector<32x256xf32>, vector<16x256xf32> -> vector<16x256xf32>
    %c1 = arith.constant 1 : index
    %c0_11 = arith.constant 0 : index
    %c0_12 = arith.constant 0 : index
    %11 = vector.load %arg3[%c1, %c0_11, %c0_12] : memref<3x16x16xf32, #tpu.memory_space<vmem>>, vector<1x16x16xf32>
    %12 = vector.shape_cast %11 : vector<1x16x16xf32> to vector<16x16xf32>
    %13 = arith.mulf %12, %3 : vector<16x16xf32>
    %cst_13 = arith.constant dense<0.000000e+00> : vector<16x32xf32>
    %14 = tpu.matmul %13, %1, %cst_13 {dimension_numbers = #tpu.dot_dimension_numbers<[1], [0], [0], [1], [0, 0, 1, 1], [], []>} : vector<16x16xf32>, vector<16x32xf32>, vector<16x32xf32> -> vector<16x32xf32>
    %15 = vector.extract_strided_slice %4 {offsets = [32, 0], sizes = [32, 256], strides = [1, 1]} : vector<96x256xf32> to vector<32x256xf32>
    %cst_14 = arith.constant dense<0.000000e+00> : vector<16x256xf32>
    %16 = tpu.matmul %14, %15, %cst_14 {dimension_numbers = #tpu.dot_dimension_numbers<[1], [0], [0], [1], [0, 0, 1, 1], [], []>} : vector<16x32xf32>, vector<32x256xf32>, vector<16x256xf32> -> vector<16x256xf32>
    %17 = arith.addf %10, %16 : vector<16x256xf32>
    %c2 = arith.constant 2 : index
    %c0_15 = arith.constant 0 : index
    %c0_16 = arith.constant 0 : index
    %18 = vector.load %arg3[%c2, %c0_15, %c0_16] : memref<3x16x16xf32, #tpu.memory_space<vmem>>, vector<1x16x16xf32>
    %19 = vector.shape_cast %18 : vector<1x16x16xf32> to vector<16x16xf32>
    %20 = arith.mulf %19, %3 : vector<16x16xf32>
    %cst_17 = arith.constant dense<0.000000e+00> : vector<16x32xf32>
    %21 = tpu.matmul %20, %1, %cst_17 {dimension_numbers = #tpu.dot_dimension_numbers<[1], [0], [0], [1], [0, 0, 1, 1], [], []>} : vector<16x16xf32>, vector<16x32xf32>, vector<16x32xf32> -> vector<16x32xf32>
    %22 = vector.extract_strided_slice %4 {offsets = [64, 0], sizes = [32, 256], strides = [1, 1]} : vector<96x256xf32> to vector<32x256xf32>
    %cst_18 = arith.constant dense<0.000000e+00> : vector<16x256xf32>
    %23 = tpu.matmul %21, %22, %cst_18 {dimension_numbers = #tpu.dot_dimension_numbers<[1], [0], [0], [1], [0, 0, 1, 1], [], []>} : vector<16x32xf32>, vector<32x256xf32>, vector<16x256xf32> -> vector<16x256xf32>
    %24 = arith.addf %17, %23 : vector<16x256xf32>
    %cst_19 = arith.constant 0.000000e+00 : f32
    %25 = vector.broadcast %cst_19 : f32 to vector<16x256xf32>
    %26 = arith.maximumf %24, %25 : vector<16x256xf32>
    %c0_20 = arith.constant 0 : index
    %c0_21 = arith.constant 0 : index
    %27 = vector.load %arg5[%c0_20, %c0_21] : memref<256x256xf32, #tpu.memory_space<vmem>>, vector<256x256xf32>
    %cst_22 = arith.constant dense<0.000000e+00> : vector<16x256xf32>
    %28 = tpu.matmul %26, %27, %cst_22 {dimension_numbers = #tpu.dot_dimension_numbers<[1], [0], [0], [1], [0, 0, 1, 1], [], []>} : vector<16x256xf32>, vector<256x256xf32>, vector<16x256xf32> -> vector<16x256xf32>
    %c0_23 = arith.constant 0 : index
    %c0_24 = arith.constant 0 : index
    %29 = vector.load %arg6[%c0_23, %c0_24] : memref<32x256xf32, #tpu.memory_space<vmem>>, vector<32x256xf32>
    %cst_25 = arith.constant dense<0.000000e+00> : vector<16x256xf32>
    %30 = tpu.matmul %1, %29, %cst_25 {dimension_numbers = #tpu.dot_dimension_numbers<[1], [0], [0], [1], [0, 0, 1, 1], [], []>} : vector<16x32xf32>, vector<32x256xf32>, vector<16x256xf32> -> vector<16x256xf32>
    %31 = arith.addf %28, %30 : vector<16x256xf32>
    %c0_26 = arith.constant 0 : index
    %c0_27 = arith.constant 0 : index
    %32 = vector.load %arg7[%c0_26, %c0_27] : memref<1x256xf32, #tpu.memory_space<vmem>>, vector<1x256xf32>
    %33 = vector.broadcast %32 : vector<1x256xf32> to vector<16x256xf32>
    %34 = arith.addf %31, %33 : vector<16x256xf32>
    %cst_28 = arith.constant 0.000000e+00 : f32
    %35 = vector.broadcast %cst_28 : f32 to vector<16x256xf32>
    %36 = arith.maximumf %34, %35 : vector<16x256xf32>
    %c0_29 = arith.constant 0 : index
    %c0_30 = arith.constant 0 : index
    %37 = vector.load %arg10[%c0_29, %c0_30] : memref<256x8xf32, #tpu.memory_space<vmem>>, vector<256x8xf32>
    %cst_31 = arith.constant dense<0.000000e+00> : vector<16x8xf32>
    %38 = tpu.matmul %36, %37, %cst_31 {dimension_numbers = #tpu.dot_dimension_numbers<[1], [0], [0], [1], [0, 0, 1, 1], [], []>} : vector<16x256xf32>, vector<256x8xf32>, vector<16x8xf32> -> vector<16x8xf32>
    %39 = arith.mulf %36, %36 : vector<16x256xf32>
    %c0_32 = arith.constant 0 : index
    %c0_33 = arith.constant 0 : index
    %40 = vector.load %arg10[%c0_32, %c0_33] : memref<256x8xf32, #tpu.memory_space<vmem>>, vector<256x8xf32>
    %cst_34 = arith.constant dense<0.000000e+00> : vector<16x8xf32>
    %41 = tpu.matmul %39, %40, %cst_34 {dimension_numbers = #tpu.dot_dimension_numbers<[1], [0], [0], [1], [0, 0, 1, 1], [], []>} : vector<16x256xf32>, vector<256x8xf32>, vector<16x8xf32> -> vector<16x8xf32>
    %c0_35 = arith.constant 0 : index
    %c0_36 = arith.constant 0 : index
    %42 = vector.load %arg11[%c0_35, %c0_36] : memref<8x256xf32, #tpu.memory_space<vmem>>, vector<8x256xf32>
    %cst_37 = arith.constant dense<0.000000e+00> : vector<16x256xf32>
    %43 = tpu.matmul %38, %42, %cst_37 {dimension_numbers = #tpu.dot_dimension_numbers<[1], [0], [0], [1], [0, 0, 1, 1], [], []>} : vector<16x8xf32>, vector<8x256xf32>, vector<16x256xf32> -> vector<16x256xf32>
    %c0_38 = arith.constant 0 : index
    %c0_39 = arith.constant 0 : index
    %44 = vector.load %arg11[%c0_38, %c0_39] : memref<8x256xf32, #tpu.memory_space<vmem>>, vector<8x256xf32>
    %cst_40 = arith.constant dense<0.000000e+00> : vector<16x256xf32>
    %45 = tpu.matmul %41, %44, %cst_40 {dimension_numbers = #tpu.dot_dimension_numbers<[1], [0], [0], [1], [0, 0, 1, 1], [], []>} : vector<16x8xf32>, vector<8x256xf32>, vector<16x256xf32> -> vector<16x256xf32>
    %46 = arith.mulf %43, %43 : vector<16x256xf32>
    %47 = arith.subf %45, %46 : vector<16x256xf32>
    %cst_41 = arith.constant 9.99999974E-6 : f32
    %48 = vector.broadcast %cst_41 : f32 to vector<16x256xf32>
    %49 = arith.addf %47, %48 : vector<16x256xf32>
    %50 = math.rsqrt %49 : vector<16x256xf32>
    %51 = arith.subf %36, %43 : vector<16x256xf32>
    %52 = arith.mulf %51, %50 : vector<16x256xf32>
    %c0_42 = arith.constant 0 : index
    %c0_43 = arith.constant 0 : index
    %53 = vector.load %arg8[%c0_42, %c0_43] : memref<1x256xf32, #tpu.memory_space<vmem>>, vector<1x256xf32>
    %54 = vector.broadcast %53 : vector<1x256xf32> to vector<16x256xf32>
    %55 = arith.mulf %52, %54 : vector<16x256xf32>
    %c0_44 = arith.constant 0 : index
    %c0_45 = arith.constant 0 : index
    %56 = vector.load %arg9[%c0_44, %c0_45] : memref<1x256xf32, #tpu.memory_space<vmem>>, vector<1x256xf32>
    %57 = vector.broadcast %56 : vector<1x256xf32> to vector<16x256xf32>
    %58 = arith.addf %55, %57 : vector<16x256xf32>
    %c0_46 = arith.constant 0 : index
    %c0_47 = arith.constant 0 : index
    %c0_48 = arith.constant 0 : index
    %59 = vector.load %arg12[%c0_46, %c0_47, %c0_48] : memref<1x16x256xf32, #tpu.memory_space<vmem>>, vector<1x16x256xf32>
    %60 = vector.shape_cast %59 : vector<1x16x256xf32> to vector<16x256xf32>
    %61 = vector.shape_cast %58 : vector<16x256xf32> to vector<1x16x256xf32>
    tpu.vector_store %arg12[%c0_46, %c0_47, %c0_48], %61 {strides = array<i32>} : memref<1x16x256xf32, #tpu.memory_space<vmem>>, vector<1x16x256xf32>,
    return
  }
  func.func @transform_0(%arg0: i32) -> (i32, i32, i32) {
    %c0_i32 = arith.constant 0 : i32
    %c0_i32_0 = arith.constant 0 : i32
    %c0_i32_1 = arith.constant 0 : i32
    return %arg0, %c0_i32, %c0_i32_0 : i32, i32, i32
  }
  func.func @transform_1(%arg0: i32) -> (i32, i32, i32) {
    %c0_i32 = arith.constant 0 : i32
    %c0_i32_0 = arith.constant 0 : i32
    %c0_i32_1 = arith.constant 0 : i32
    return %arg0, %c0_i32, %c0_i32_0 : i32, i32, i32
  }
  func.func @transform_2(%arg0: i32) -> (i32, i32, i32) {
    %c0_i32 = arith.constant 0 : i32
    %c0_i32_0 = arith.constant 0 : i32
    %c0_i32_1 = arith.constant 0 : i32
    %c0_i32_2 = arith.constant 0 : i32
    return %c0_i32, %c0_i32_0, %c0_i32_1 : i32, i32, i32
  }
  func.func @transform_3(%arg0: i32) -> (i32, i32) {
    %c0_i32 = arith.constant 0 : i32
    %c0_i32_0 = arith.constant 0 : i32
    %c0_i32_1 = arith.constant 0 : i32
    return %c0_i32, %c0_i32_0 : i32, i32
  }
  func.func @transform_4(%arg0: i32) -> (i32, i32) {
    %c0_i32 = arith.constant 0 : i32
    %c0_i32_0 = arith.constant 0 : i32
    %c0_i32_1 = arith.constant 0 : i32
    return %c0_i32, %c0_i32_0 : i32, i32
  }
  func.func @transform_5(%arg0: i32) -> (i32, i32) {
    %c0_i32 = arith.constant 0 : i32
    %c0_i32_0 = arith.constant 0 : i32
    %c0_i32_1 = arith.constant 0 : i32
    return %c0_i32, %c0_i32_0 : i32, i32
  }
  func.func @transform_6(%arg0: i32) -> (i32, i32) {
    %c0_i32 = arith.constant 0 : i32
    %c0_i32_0 = arith.constant 0 : i32
    %c0_i32_1 = arith.constant 0 : i32
    return %c0_i32, %c0_i32_0 : i32, i32
  }
  func.func @transform_7(%arg0: i32) -> (i32, i32) {
    %c0_i32 = arith.constant 0 : i32
    %c0_i32_0 = arith.constant 0 : i32
    %c0_i32_1 = arith.constant 0 : i32
    return %c0_i32, %c0_i32_0 : i32, i32
  }
  func.func @transform_8(%arg0: i32) -> (i32, i32) {
    %c0_i32 = arith.constant 0 : i32
    %c0_i32_0 = arith.constant 0 : i32
    %c0_i32_1 = arith.constant 0 : i32
    return %c0_i32, %c0_i32_0 : i32, i32
  }
  func.func @transform_9(%arg0: i32) -> (i32, i32) {
    %c0_i32 = arith.constant 0 : i32
    %c0_i32_0 = arith.constant 0 : i32
    %c0_i32_1 = arith.constant 0 : i32
    return %c0_i32, %c0_i32_0 : i32, i32
  }
  func.func @transform_10(%arg0: i32) -> (i32, i32) {
    %c0_i32 = arith.constant 0 : i32
    %c0_i32_0 = arith.constant 0 : i32
    %c0_i32_1 = arith.constant 0 : i32
    return %c0_i32, %c0_i32_0 : i32, i32
  }
  func.func @transform_11(%arg0: i32) -> (i32, i32, i32) {
    %c0_i32 = arith.constant 0 : i32
    %c0_i32_0 = arith.constant 0 : i32
    %c0_i32_1 = arith.constant 0 : i32
    return %arg0, %c0_i32, %c0_i32_0 : i32, i32, i32
  }
}

</mosaic_0001>

<llo_original>
// kernel: forward.1
$region0: #{forward.1}
  #allocation0 [shape = 'u32[]', space=smem, size = 0x4, offset = 0x4, fixed_abs, tag = 'smem constant byte address 0x4 - core index']
  #allocation1 [shape = 'u32[144,128]{1,0:T(1,128)}', space=vmem, size = 0x12000, scoped, tag = 'internal scratch']
  %s0 = inlined_call_operand.vmem [shape: f32[2,16,32], index: 0, kind: input, shape index: {}]
  %s1 = inlined_call_operand.vmem [shape: f32[2,16,16], index: 1, kind: input, shape index: {}]
  %s2 = inlined_call_operand.vmem [shape: f32[3,16,16], index: 2, kind: input, shape index: {}]
  %s3 = inlined_call_operand.vmem [shape: f32[96,256], index: 3, kind: input, shape index: {}]
  %s4 = inlined_call_operand.vmem [shape: f32[256,256], index: 4, kind: input, shape index: {}]
  %s5 = inlined_call_operand.vmem [shape: f32[32,256], index: 5, kind: input, shape index: {}]
  %s6 = inlined_call_operand.vmem [shape: f32[1,256], index: 6, kind: input, shape index: {}]
  %s7 = inlined_call_operand.vmem [shape: f32[1,256], index: 7, kind: input, shape index: {}]
  %s8 = inlined_call_operand.vmem [shape: f32[1,256], index: 8, kind: input, shape index: {}]
  %s9 = inlined_call_operand.vmem [shape: f32[256,8], index: 9, kind: input, shape index: {}]
  %s10 = inlined_call_operand.vmem [shape: f32[8,256], index: 10, kind: input, shape index: {}]
  %s11 = inlined_call_operand.vmem [shape: f32[2,16,256], index: 11, kind: output, shape index: {}]
  %s12 = sld [smem:[#allocation0]]
  $region77: #{forward.1} parent=0
    _
  %s14 = ssub.s32 1, %s12
  %s15 = scalar_select 0, %s14, %s12
  loop: start=0, step=1, limit=4
  $region2: #{forward.1} parent=0 // loop_pre_header
    _
  $region3: #{forward.1} parent=0 // loop_header
    %s17 = sphi 0, %s21
    %p18 = scmp.ge.s32.totalorder %s17, 4
    %s27 = sphi 0, %s29
    %s30 = sphi 0, %s27
    %s31 = sphi 0, %s30
    %s47 = sphi 0, %s31
    %s53 = sphi 0, %s55
    %s56 = sphi 0, %s53
    %s57 = sphi 0, %s56
    %s73 = sphi 0, %s57
    %s77 = sphi 0, %s77
    %s79 = sphi 0, %s77
    %s80 = sphi 0, %s79
    %s94 = sphi 0, %s80
    %s98 = sphi 0, %s98
    %s100 = sphi 0, %s98
    %s101 = sphi 0, %s100
    %s115 = sphi 0, %s101
    %s119 = sphi 0, %s119
    %s121 = sphi 0, %s119
    %s122 = sphi 0, %s121
    %s136 = sphi 0, %s122
    %s140 = sphi 0, %s140
    %s142 = sphi 0, %s140
    %s143 = sphi 0, %s142
    %s157 = sphi 0, %s143
    %s161 = sphi 0, %s161
    %s163 = sphi 0, %s161
    %s164 = sphi 0, %s163
    %s178 = sphi 0, %s164
    %s182 = sphi 0, %s182
    %s184 = sphi 0, %s182
    %s185 = sphi 0, %s184
    %s199 = sphi 0, %s185
    %s203 = sphi 0, %s203
    %s205 = sphi 0, %s203
    %s206 = sphi 0, %s205
    %s220 = sphi 0, %s206
    %s224 = sphi 0, %s224
    %s226 = sphi 0, %s224
    %s227 = sphi 0, %s226
    %s241 = sphi 0, %s227
    %s245 = sphi 0, %s245
    %s247 = sphi 0, %s245
    %s248 = sphi 0, %s247
    %s262 = sphi 0, %s248
    %s268 = sphi 0, %s270
    %s271 = sphi 0, %s268
    %s272 = sphi 0, %s271
    %s288 = sphi 0, %s272
  $region4: #{forward.1} parent=0 // loop_header_branch
    %20 = sbr.rel (%p18) target = $region8
  $region5: #{forward.1} parent=0 // loop_body
    %s22 = ssub.s32 %s17, 1
    %s23 = ssub.s32 %s17, 2
    %s24 = sadd.s32 %s17, 1
    %s25 = ssub.s32 %s17, %s24
    %p26 = scmp.eq.s32.totalorder %s25, 0
    %s28 = sadd.s32 %s27, 1
    %s29 = scalar_select %p26, %s27, %s28
    %p32 = pneg %p26
    %p33 = scmp.eq.s32.totalorder %s17, 1
    %p34 = por %p32, %p33
    %p35 = scmp.ne.s32.totalorder %s27, %s30
    %p36 = scmp.eq.s32.totalorder %s17, 0
    %p37 = por %p35, %p36
    %p38 = scmp.ne.s32.totalorder %s27, %s30
    %p39 = scmp.eq.s32.totalorder %s22, 1
    %p40 = por %p38, %p39
    %p41 = scmp.ne.s32.totalorder %s30, %s31
    %p42 = scmp.eq.s32.totalorder %s22, 0
    %p43 = por %p41, %p42
    %p44 = scmp.ne.s32.totalorder %s30, %s31
    %p45 = scmp.eq.s32.totalorder %s23, 1
    %p46 = por %p44, %p45
    %p48 = scmp.ne.s32.totalorder %s31, %s47
    %p49 = scmp.eq.s32.totalorder %s23, 0
    %p50 = por %p48, %p49
    %s51 = ssub.s32 %s17, %s24
    %p52 = scmp.eq.s32.totalorder %s51, 0
    %s54 = sadd.s32 %s53, 1
    %s55 = scalar_select %p52, %s53, %s54
    %p58 = pneg %p52
    %p59 = scmp.eq.s32.totalorder %s17, 1
    %p60 = por %p58, %p59
    %p61 = scmp.ne.s32.totalorder %s53, %s56
    %p62 = scmp.eq.s32.totalorder %s17, 0
    %p63 = por %p61, %p62
    %p64 = scmp.ne.s32.totalorder %s53, %s56
    %p65 = scmp.eq.s32.totalorder %s22, 1
    %p66 = por %p64, %p65
    %p67 = scmp.ne.s32.totalorder %s56, %s57
    %p68 = scmp.eq.s32.totalorder %s22, 0
    %p69 = por %p67, %p68
    %p70 = scmp.ne.s32.totalorder %s56, %s57
    %p71 = scmp.eq.s32.totalorder %s23, 1
    %p72 = por %p70, %p71
    %p74 = scmp.ne.s32.totalorder %s57, %s73
    %p75 = scmp.eq.s32.totalorder %s23, 0
    %p76 = por %p74, %p75
    %s78 = sadd.s32 %s77, 1
    %p81 = scmp.eq.s32.totalorder %s17, 1
    %p82 = scmp.ne.s32.totalorder %s77, %s79
    %p83 = scmp.eq.s32.totalorder %s17, 0
    %p84 = por %p82, %p83
    %p85 = scmp.ne.s32.totalorder %s77, %s79
    %p86 = scmp.eq.s32.totalorder %s22, 1
    %p87 = por %p85, %p86
    %p88 = scmp.ne.s32.totalorder %s79, %s80
    %p89 = scmp.eq.s32.totalorder %s22, 0
    %p90 = por %p88, %p89
    %p91 = scmp.ne.s32.totalorder %s79, %s80
    %p92 = scmp.eq.s32.totalorder %s23, 1
    %p93 = por %p91, %p92
    %p95 = scmp.ne.s32.totalorder %s80, %s94
    %p96 = scmp.eq.s32.totalorder %s23, 0
    %p97 = por %p95, %p96
    %s99 = sadd.s32 %s98, 1
    %p102 = scmp.eq.s32.totalorder %s17, 1
    %p103 = scmp.ne.s32.totalorder %s98, %s100
    %p104 = scmp.eq.s32.totalorder %s17, 0
    %p105 = por %p103, %p104
    %p106 = scmp.ne.s32.totalorder %s98, %s100
    %p107 = scmp.eq.s32.totalorder %s22, 1
    %p108 = por %p106, %p107
    %p109 = scmp.ne.s32.totalorder %s100, %s101
    %p110 = scmp.eq.s32.totalorder %s22, 0
    %p111 = por %p109, %p110
    %p112 = scmp.ne.s32.totalorder %s100, %s101
    %p113 = scmp.eq.s32.totalorder %s23, 1
    %p114 = por %p112, %p113
    %p116 = scmp.ne.s32.totalorder %s101, %s115
    %p117 = scmp.eq.s32.totalorder %s23, 0
    %p118 = por %p116, %p117
    %s120 = sadd.s32 %s119, 1
    %p123 = scmp.eq.s32.totalorder %s17, 1
    %p124 = scmp.ne.s32.totalorder %s119, %s121
    %p125 = scmp.eq.s32.totalorder %s17, 0
    %p126 = por %p124, %p125
    %p127 = scmp.ne.s32.totalorder %s119, %s121
    %p128 = scmp.eq.s32.totalorder %s22, 1
    %p129 = por %p127, %p128
    %p130 = scmp.ne.s32.totalorder %s121, %s122
    %p131 = scmp.eq.s32.totalorder %s22, 0
    %p132 = por %p130, %p131
    %p133 = scmp.ne.s32.totalorder %s121, %s122
    %p134 = scmp.eq.s32.totalorder %s23, 1
    %p135 = por %p133, %p134
    %p137 = scmp.ne.s32.totalorder %s122, %s136
    %p138 = scmp.eq.s32.totalorder %s23, 0
    %p139 = por %p137, %p138
    %s141 = sadd.s32 %s140, 1
    %p144 = scmp.eq.s32.totalorder %s17, 1
    %p145 = scmp.ne.s32.totalorder %s140, %s142
    %p146 = scmp.eq.s32.totalorder %s17, 0
    %p147 = por %p145, %p146
    %p148 = scmp.ne.s32.totalorder %s140, %s142
    %p149 = scmp.eq.s32.totalorder %s22, 1
    %p150 = por %p148, %p149
    %p151 = scmp.ne.s32.totalorder %s142, %s143
    %p152 = scmp.eq.s32.totalorder %s22, 0
    %p153 = por %p151, %p152
    %p154 = scmp.ne.s32.totalorder %s142, %s143
    %p155 = scmp.eq.s32.totalorder %s23, 1
    %p156 = por %p154, %p155
    %p158 = scmp.ne.s32.totalorder %s143, %s157
    %p159 = scmp.eq.s32.totalorder %s23, 0
    %p160 = por %p158, %p159
    %s162 = sadd.s32 %s161, 1
    %p165 = scmp.eq.s32.totalorder %s17, 1
    %p166 = scmp.ne.s32.totalorder %s161, %s163
    %p167 = scmp.eq.s32.totalorder %s17, 0
    %p168 = por %p166, %p167
    %p169 = scmp.ne.s32.totalorder %s161, %s163
    %p170 = scmp.eq.s32.totalorder %s22, 1
    %p171 = por %p169, %p170
    %p172 = scmp.ne.s32.totalorder %s163, %s164
    %p173 = scmp.eq.s32.totalorder %s22, 0
    %p174 = por %p172, %p173
    %p175 = scmp.ne.s32.totalorder %s163, %s164
    %p176 = scmp.eq.s32.totalorder %s23, 1
    %p177 = por %p175, %p176
    %p179 = scmp.ne.s32.totalorder %s164, %s178
    %p180 = scmp.eq.s32.totalorder %s23, 0
    %p181 = por %p179, %p180
    %s183 = sadd.s32 %s182, 1
    %p186 = scmp.eq.s32.totalorder %s17, 1
    %p187 = scmp.ne.s32.totalorder %s182, %s184
    %p188 = scmp.eq.s32.totalorder %s17, 0
    %p189 = por %p187, %p188
    %p190 = scmp.ne.s32.totalorder %s182, %s184
    %p191 = scmp.eq.s32.totalorder %s22, 1
    %p192 = por %p190, %p191
    %p193 = scmp.ne.s32.totalorder %s184, %s185
    %p194 = scmp.eq.s32.totalorder %s22, 0
    %p195 = por %p193, %p194
    %p196 = scmp.ne.s32.totalorder %s184, %s185
    %p197 = scmp.eq.s32.totalorder %s23, 1
    %p198 = por %p196, %p197
    %p200 = scmp.ne.s32.totalorder %s185, %s199
    %p201 = scmp.eq.s32.totalorder %s23, 0
    %p202 = por %p200, %p201
    %s204 = sadd.s32 %s203, 1
    %p207 = scmp.eq.s32.totalorder %s17, 1
    %p208 = scmp.ne.s32.totalorder %s203, %s205
    %p209 = scmp.eq.s32.totalorder %s17, 0
    %p210 = por %p208, %p209
    %p211 = scmp.ne.s32.totalorder %s203, %s205
    %p212 = scmp.eq.s32.totalorder %s22, 1
    %p213 = por %p211, %p212
    %p214 = scmp.ne.s32.totalorder %s205, %s206
    %p215 = scmp.eq.s32.totalorder %s22, 0
    %p216 = por %p214, %p215
    %p217 = scmp.ne.s32.totalorder %s205, %s206
    %p218 = scmp.eq.s32.totalorder %s23, 1
    %p219 = por %p217, %p218
    %p221 = scmp.ne.s32.totalorder %s206, %s220
    %p222 = scmp.eq.s32.totalorder %s23, 0
    %p223 = por %p221, %p222
    %s225 = sadd.s32 %s224, 1
    %p228 = scmp.eq.s32.totalorder %s17, 1
    %p229 = scmp.ne.s32.totalorder %s224, %s226
    %p230 = scmp.eq.s32.totalorder %s17, 0
    %p231 = por %p229, %p230
    %p232 = scmp.ne.s32.totalorder %s224, %s226
    %p233 = scmp.eq.s32.totalorder %s22, 1
    %p234 = por %p232, %p233
    %p235 = scmp.ne.s32.totalorder %s226, %s227
    %p236 = scmp.eq.s32.totalorder %s22, 0
    %p237 = por %p235, %p236
    %p238 = scmp.ne.s32.totalorder %s226, %s227
    %p239 = scmp.eq.s32.totalorder %s23, 1
    %p240 = por %p238, %p239
    %p242 = scmp.ne.s32.totalorder %s227, %s241
    %p243 = scmp.eq.s32.totalorder %s23, 0
    %p244 = por %p242, %p243
    %s246 = sadd.s32 %s245, 1
    %p249 = scmp.eq.s32.totalorder %s17, 1
    %p250 = scmp.ne.s32.totalorder %s245, %s247
    %p251 = scmp.eq.s32.totalorder %s17, 0
    %p252 = por %p250, %p251
    %p253 = scmp.ne.s32.totalorder %s245, %s247
    %p254 = scmp.eq.s32.totalorder %s22, 1
    %p255 = por %p253, %p254
    %p256 = scmp.ne.s32.totalorder %s247, %s248
    %p257 = scmp.eq.s32.totalorder %s22, 0
    %p258 = por %p256, %p257
    %p259 = scmp.ne.s32.totalorder %s247, %s248
    %p260 = scmp.eq.s32.totalorder %s23, 1
    %p261 = por %p259, %p260
    %p263 = scmp.ne.s32.totalorder %s248, %s262
    %p264 = scmp.eq.s32.totalorder %s23, 0
    %p265 = por %p263, %p264
    %s266 = ssub.s32 %s17, %s24
    %p267 = scmp.eq.s32.totalorder %s266, 0
    %s269 = sadd.s32 %s268, 1
    %s270 = scalar_select %p267, %s268, %s269
    %p273 = pneg %p267
    %p274 = scmp.eq.s32.totalorder %s17, 1
    %p275 = por %p273, %p274
    %p276 = scmp.ne.s32.totalorder %s268, %s271
    %p277 = scmp.eq.s32.totalorder %s17, 0
    %p278 = por %p276, %p277
    %p279 = scmp.ne.s32.totalorder %s268, %s271
    %p280 = scmp.eq.s32.totalorder %s22, 1
    %p281 = por %p279, %p280
    %p282 = scmp.ne.s32.totalorder %s271, %s272
    %p283 = scmp.eq.s32.totalorder %s22, 0
    %p284 = por %p282, %p283
    %p285 = scmp.ne.s32.totalorder %s271, %s272
    %p286 = scmp.eq.s32.totalorder %s23, 1
    %p287 = por %p285, %p286
    %p289 = scmp.ne.s32.totalorder %s272, %s288
    %p290 = scmp.eq.s32.totalorder %s23, 0
    %p291 = por %p289, %p290
    %p292 = scmp.le.s32.totalorder 1, %s17
    %p293 = scmp.lt.s32.totalorder %s17, 3
    %p294 = pnand %p292, %p293
    %p295 = pneg %p294
    // Predicated region
    $region9: #{forward.1} parent=5 // pred_check
      _
    $region10: #{forward.1} parent=5 // pred_check_branch
      %297 = sbr.rel (%p294) target = $region12
    $region11: #{forward.1} parent=5 // pred_region
      %s298 = ssub.s32 %s17, 1
      // Predicated region
      $region13: #{forward.1} parent=11 // pred_check
        %p299 = pneg %p90
      $region14: #{forward.1} parent=11 // pred_check_branch
        %301 = sbr.rel (%p299) target = $region16
      $region15: #{forward.1} parent=11 // pred_region
        _
      $region16: #{forward.1} parent=11 // pred_fallthru
        _
      // Predicated region
      $region17: #{forward.1} parent=11 // pred_check
        %p302 = pneg %p111
      $region18: #{forward.1} parent=11 // pred_check_branch
        %304 = sbr.rel (%p302) target = $region20
      $region19: #{forward.1} parent=11 // pred_region
        _
      $region20: #{forward.1} parent=11 // pred_fallthru
        _
      // Predicated region
      $region21: #{forward.1} parent=11 // pred_check
        %p305 = pneg %p132
      $region22: #{forward.1} parent=11 // pred_check_branch
        %307 = sbr.rel (%p305) target = $region24
      $region23: #{forward.1} parent=11 // pred_region
        _
      $region24: #{forward.1} parent=11 // pred_fallthru
        _
      // Predicated region
      $region25: #{forward.1} parent=11 // pred_check
        %p308 = pneg %p153
      $region26: #{forward.1} parent=11 // pred_check_branch
        %310 = sbr.rel (%p308) target = $region28
      $region27: #{forward.1} parent=11 // pred_region
        _
      $region28: #{forward.1} parent=11 // pred_fallthru
        _
      // Predicated region
      $region29: #{forward.1} parent=11 // pred_check
        %p311 = pneg %p174
      $region30: #{forward.1} parent=11 // pred_check_branch
        %313 = sbr.rel (%p311) target = $region32
      $region31: #{forward.1} parent=11 // pred_region
        _
      $region32: #{forward.1} parent=11 // pred_fallthru
        _
      // Predicated region
      $region33: #{forward.1} parent=11 // pred_check
        %p314 = pneg %p195
      $region34: #{forward.1} parent=11 // pred_check_branch
        %316 = sbr.rel (%p314) target = $region36
      $region35: #{forward.1} parent=11 // pred_region
        _
      $region36: #{forward.1} parent=11 // pred_fallthru
        _
      // Predicated region
      $region37: #{forward.1} parent=11 // pred_check
        %p317 = pneg %p216
      $region38: #{forward.1} parent=11 // pred_check_branch
        %319 = sbr.rel (%p317) target = $region40
      $region39: #{forward.1} parent=11 // pred_region
        _
      $region40: #{forward.1} parent=11 // pred_fallthru
        _
      // Predicated region
      $region41: #{forward.1} parent=11 // pred_check
        %p320 = pneg %p237
      $region42: #{forward.1} parent=11 // pred_check_branch
        %322 = sbr.rel (%p320) target = $region44
      $region43: #{forward.1} parent=11 // pred_region
        _
      $region44: #{forward.1} parent=11 // pred_fallthru
        _
      // Predicated region
      $region45: #{forward.1} parent=11 // pred_check
        %p323 = pneg %p258
      $region46: #{forward.1} parent=11 // pred_check_branch
        %325 = sbr.rel (%p323) target = $region48
      $region47: #{forward.1} parent=11 // pred_region
        _
      $region48: #{forward.1} parent=11 // pred_fallthru
        _
    $region12: #{forward.1} parent=5 // pred_fallthru
      _
    %p326 = scmp.lt.s32.totalorder %s17, 2
    // Predicated region
    $region49: #{forward.1} parent=5 // pred_check
      %p327 = pneg %p326
    $region50: #{forward.1} parent=5 // pred_check_branch
      %329 = sbr.rel (%p327) target = $region52
    $region51: #{forward.1} parent=5 // pred_region
      // Predicated region
      $region53: #{forward.1} parent=51 // pred_check
        %p330 = pneg %p37
      $region54: #{forward.1} parent=51 // pred_check_branch
        %332 = sbr.rel (%p330) target = $region56
      $region55: #{forward.1} parent=51 // pred_region
        %p333 = scmp.lt.s32.totalorder %s17, 1
        %s334 = scalar_select %p333, %s17, 1
        %s335 = smul.addr %s334, 2
        %s336 = smul.addr %s335, 8
        %s337 = scalar_lea.vmem %s0, %s336
      $region56: #{forward.1} parent=51 // pred_fallthru
        _
      // Predicated region
      $region57: #{forward.1} parent=51 // pred_check
        %p338 = pneg %p63
      $region58: #{forward.1} parent=51 // pred_check_branch
        %340 = sbr.rel (%p338) target = $region60
      $region59: #{forward.1} parent=51 // pred_region
        %p341 = scmp.lt.s32.totalorder %s17, 1
        %s342 = scalar_select %p341, %s17, 1
        %s343 = smul.addr %s342, 2
        %s344 = smul.addr %s343, 8
        %s345 = scalar_lea.vmem %s1, %s344
      $region60: #{forward.1} parent=51 // pred_fallthru
        _
    $region52: #{forward.1} parent=5 // pred_fallthru
      _
    %p346 = scmp.le.s32.totalorder 1, %s17
    %p347 = scmp.lt.s32.totalorder %s17, 3
    %p348 = pnand %p346, %p347
    %p349 = pneg %p348
    // Predicated region
    $region61: #{forward.1} parent=5 // pred_check
      _
    $region62: #{forward.1} parent=5 // pred_check_branch
      %351 = sbr.rel (%p348) target = $region64
    $region63: #{forward.1} parent=5 // pred_region
      %s352 = ssub.s32 %s17, 1
      %p353 = scmp.lt.s32.totalorder %s22, 1
      %s354 = scalar_select %p353, %s22, 1
      %s355 = smul.addr %s354, 2
      %s356 = smul.addr %s355, 8
      %s357 = scalar_lea.vmem %s0, %s356
      %p358 = pneg %p43
      %p359 = pneg %p40
      %p360 = scmp.lt.s32.totalorder %s22, 1
      %s361 = scalar_select %p360, %s22, 1
      %s362 = smul.addr %s361, 2
      %s363 = smul.addr %s362, 8
      %s364 = scalar_lea.vmem %s1, %s363
      %p365 = pneg %p69
      %p366 = pneg %p66
      %p367 = pneg %p90
      %p368 = pneg %p87
      %p369 = pneg %p111
      %p370 = pneg %p108
      %p371 = pneg %p132
      %p372 = pneg %p129
      %p373 = pneg %p153
      %p374 = pneg %p150
      %p375 = pneg %p174
      %p376 = pneg %p171
      %p377 = pneg %p195
      %p378 = pneg %p192
      %p379 = pneg %p216
      %p380 = pneg %p213
      %p381 = pneg %p237
      %p382 = pneg %p234
      %p383 = pneg %p258
      %p384 = pneg %p255
      %p385 = pneg %p284
      %p386 = pneg %p281
      %p387 = scmp.lt.s32.totalorder %s22, 1
      %s388 = scalar_select %p387, %s22, 1
      %s389 = smul.addr %s388, 4
      %s390 = smul.addr %s389, 8
      %s391 = scalar_lea.vmem %s11, %s390
      %p392 = scmp.lt.s32.totalorder %s22, 1
      %s393 = scalar_select %p392, %s22, 1
      %s394 = smul.addr %s393, 2
      %s395 = smul.addr %s394, 8
      %s396 = scalar_lea.vmem %s0, %s395
      %p397 = scmp.lt.s32.totalorder %s22, 1
      %s398 = scalar_select %p397, %s22, 1
      %s399 = smul.addr %s398, 2
      %s400 = smul.addr %s399, 8
      %s401 = scalar_lea.vmem %s1, %s400
      %p402 = scmp.lt.s32.totalorder %s22, 1
      %s403 = scalar_select %p402, %s22, 1
      %s404 = smul.addr %s403, 4
      %s405 = smul.addr %s404, 8
      %s406 = scalar_lea.vmem %s11, %s405
      %v407 = vld [vmem:[%s396] sm:$0xff]
      %v408 = vld [vmem:[%s396 + $0x8] sm:$0xff]
      %v409 = vld [vmem:[%s401] sm:$0xff]
      %v410 = vld [vmem:[%s401 + $0x8] sm:$0xff]
      %v411 = vld [vmem:[%s3] sm:$0xff]
      %v412 = vld [vmem:[%s3 + $0x8] sm:$0xff]
      %v413 = vld [vmem:[%s3 + $0x10] sm:$0xff]
      %v414 = vld [vmem:[%s3 + $0x18] sm:$0xff]
      %v415 = vld [vmem:[%s3 + $0x20] sm:$0xff]
      %v416 = vld [vmem:[%s3 + $0x28] sm:$0xff]
      %v417 = vld [vmem:[%s3 + $0x30] sm:$0xff]
      %v418 = vld [vmem:[%s3 + $0x38] sm:$0xff]
      %v419 = vld [vmem:[%s3 + $0x40] sm:$0xff]
      %v420 = vld [vmem:[%s3 + $0x48] sm:$0xff]
      %v421 = vld [vmem:[%s3 + $0x50] sm:$0xff]
      %v422 = vld [vmem:[%s3 + $0x58] sm:$0xff]
      %v423 = vld [vmem:[%s3 + $0x60] sm:$0xff]
      %v424 = vld [vmem:[%s3 + $0x68] sm:$0xff]
      %v425 = vld [vmem:[%s3 + $0x70] sm:$0xff]
      %v426 = vld [vmem:[%s3 + $0x78] sm:$0xff]
      %v427 = vld [vmem:[%s3 + $0x80] sm:$0xff]
      %v428 = vld [vmem:[%s3 + $0x88] sm:$0xff]
      %v429 = vld [vmem:[%s3 + $0x90] sm:$0xff]
      %v430 = vld [vmem:[%s3 + $0x98] sm:$0xff]
      %v431 = vld [vmem:[%s3 + $0xa0] sm:$0xff]
      %v432 = vld [vmem:[%s3 + $0xa8] sm:$0xff]
      %v433 = vld [vmem:[%s3 + $0xb0] sm:$0xff]
      %v434 = vld [vmem:[%s3 + $0xb8] sm:$0xff]
      %v435 = vld [vmem:[%s2] sm:$0xff]
      %v436 = vld [vmem:[%s2 + $0x8] sm:$0xff]
      %v437 = vmul.f32 %v435, %v409
      %v438 = vmul.f32 %v436, %v410
      %vm439 = vcmask 130048
      %v441 = vsel %vm439, %v437, 0
      %v444 = vsel %vm439, %v438, 0
      %446 = vmatprep.subr.mxu0 0.0
      %447 = vmatpush1.msra.mxu0 %v407
      %448 = vmatprep.subr.mxu0 0.0
      %449 = vmatpush1.msra.mxu0 %v408
      %450 = vmatprep.subr.mxu0 0.0
      %451 = vmatpush1.msra.mxu0 0.0
      %452 = vmatprep.subr.mxu0 0.0
      %453 = vmatpush1.msra.mxu0 0.0
      %454 = vmatprep.subr.mxu0 0.0
      %455 = vmatpush1.msra.mxu0 0.0
      %456 = vmatprep.subr.mxu0 0.0
      %457 = vmatpush1.msra.mxu0 0.0
      %458 = vmatprep.subr.mxu0 0.0
      %459 = vmatpush1.msra.mxu0 0.0
      %460 = vmatprep.subr.mxu0 0.0
      %461 = vmatpush1.msra.mxu0 0.0
      %462 = vmatprep.subr.mxu0 0.0
      %463 = vmatpush1.msra.mxu0 0.0
      %464 = vmatprep.subr.mxu0 0.0
      %465 = vmatpush1.msra.mxu0 0.0
      %466 = vmatprep.subr.mxu0 0.0
      %467 = vmatpush1.msra.mxu0 0.0
      %468 = vmatprep.subr.mxu0 0.0
      %469 = vmatpush1.msra.mxu0 0.0
      %470 = vmatprep.subr.mxu0 0.0
      %471 = vmatpush1.msra.mxu0 0.0
      %472 = vmatprep.subr.mxu0 0.0
      %473 = vmatpush1.msra.mxu0 0.0
      %474 = vmatprep.subr.mxu0 0.0
      %475 = vmatpush1.msra.mxu0 0.0
      %476 = vmatprep.subr.mxu0 0.0
      %477 = vmatpush1.msra.mxu0 0.0
      %478 = vmatprep.subr.mxu0 0.0
      %479 = vmatpush1.msra.mxu0 0.0
      %480 = vmatprep.subr.mxu0 0.0
      %481 = vmatpush1.msra.mxu0 0.0
      %482 = vmatprep.subr.mxu0 0.0
      %483 = vmatpush1.msra.mxu0 0.0
      %484 = vmatprep.subr.mxu0 0.0
      %485 = vmatpush1.msra.mxu0 0.0
      %486 = vmatprep.subr.mxu0 0.0
      %487 = vmatpush1.msra.mxu0 0.0
      %488 = vmatprep.subr.mxu0 0.0
      %489 = vmatpush1.msra.mxu0 0.0
      %490 = vmatprep.subr.mxu0 0.0
      %491 = vmatpush1.msra.mxu0 0.0
      %492 = vmatprep.subr.mxu0 0.0
      %493 = vmatpush1.msra.mxu0 0.0
      %494 = vmatprep.subr.mxu0 0.0
      %495 = vmatpush1.msra.mxu0 0.0
      %496 = vmatprep.subr.mxu0 0.0
      %497 = vmatpush1.msra.mxu0 0.0
      %498 = vmatprep.subr.mxu0 0.0
      %499 = vmatpush1.msra.mxu0 0.0
      %500 = vmatprep.subr.mxu0 0.0
      %501 = vmatpush1.msra.mxu0 0.0
      %502 = vmatprep.subr.mxu0 0.0
      %503 = vmatpush1.msra.mxu0 0.0
      %504 = vmatprep.subr.mxu0 0.0
      %505 = vmatpush1.msra.mxu0 0.0
      %506 = vmatprep.subr.mxu0 0.0
      %507 = vmatpush1.msra.mxu0 0.0
      %508 = vmatprep.subr.mxu0 0.0
      %509 = vmatpush1.msra.mxu0 0.0
      %510 = vmatprep.mubr.f32.mxu0 0.0
      %511 = vmatmul.mubr.f32.gmra.mrb[0].mxu0 %v441
      %v512 = vpop.f32.mrb[0].mxu0
      %v513 = vadd.f32 0.0, %v512
      %v514 = vpop.f32.mrb[0].mxu0
      %515 = vmatprep.mubr.f32.mxu0 0.0
      %516 = vmatmul.mubr.f32.gmra.mrb[0].mxu0 %v444
      %v517 = vpop.f32.mrb[0].mxu0
      %v518 = vadd.f32 0.0, %v517
      %v519 = vpop.f32.mrb[0].mxu0
      %520 = vdwg.mxu0
      %s521 = scalar_lea.vmem %s2, 16
      %v522 = vld [vmem:[%s521] sm:$0xff]
      %v523 = vld [vmem:[%s521 + $0x8] sm:$0xff]
      %v524 = vmul.f32 %v522, %v409
      %v525 = vmul.f32 %v523, %v410
      %v527 = vsel %vm439, %v524, 0
      %v530 = vsel %vm439, %v525, 0
      %532 = vmatprep.subr.mxu0 0.0
      %533 = vmatpush1.msra.mxu0 %v407
      %534 = vmatprep.subr.mxu0 0.0
      %535 = vmatpush1.msra.mxu0 %v408
      %536 = vmatprep.subr.mxu0 0.0
      %537 = vmatpush1.msra.mxu0 0.0
      %538 = vmatprep.subr.mxu0 0.0
      %539 = vmatpush1.msra.mxu0 0.0
      %540 = vmatprep.subr.mxu0 0.0
      %541 = vmatpush1.msra.mxu0 0.0
      %542 = vmatprep.subr.mxu0 0.0
      %543 = vmatpush1.msra.mxu0 0.0
      %544 = vmatprep.subr.mxu0 0.0
      %545 = vmatpush1.msra.mxu0 0.0
      %546 = vmatprep.subr.mxu0 0.0
      %547 = vmatpush1.msra.mxu0 0.0
      %548 = vmatprep.subr.mxu0 0.0
      %549 = vmatpush1.msra.mxu0 0.0
      %550 = vmatprep.subr.mxu0 0.0
      %551 = vmatpush1.msra.mxu0 0.0
      %552 = vmatprep.subr.mxu0 0.0
      %553 = vmatpush1.msra.mxu0 0.0
      %554 = vmatprep.subr.mxu0 0.0
      %555 = vmatpush1.msra.mxu0 0.0
      %556 = vmatprep.subr.mxu0 0.0
      %557 = vmatpush1.msra.mxu0 0.0
      %558 = vmatprep.subr.mxu0 0.0
      %559 = vmatpush1.msra.mxu0 0.0
      %560 = vmatprep.subr.mxu0 0.0
      %561 = vmatpush1.msra.mxu0 0.0
      %562 = vmatprep.subr.mxu0 0.0
      %563 = vmatpush1.msra.mxu0 0.0
      %564 = vmatprep.subr.mxu0 0.0
      %565 = vmatpush1.msra.mxu0 0.0
      %566 = vmatprep.subr.mxu0 0.0
      %567 = vmatpush1.msra.mxu0 0.0
      %568 = vmatprep.subr.mxu0 0.0
      %569 = vmatpush1.msra.mxu0 0.0
      %570 = vmatprep.subr.mxu0 0.0
      %571 = vmatpush1.msra.mxu0 0.0
      %572 = vmatprep.subr.mxu0 0.0
      %573 = vmatpush1.msra.mxu0 0.0
      %574 = vmatprep.subr.mxu0 0.0
      %575 = vmatpush1.msra.mxu0 0.0
      %576 = vmatprep.subr.mxu0 0.0
      %577 = vmatpush1.msra.mxu0 0.0
      %578 = vmatprep.subr.mxu0 0.0
      %579 = vmatpush1.msra.mxu0 0.0
      %580 = vmatprep.subr.mxu0 0.0
      %581 = vmatpush1.msra.mxu0 0.0
      %582 = vmatprep.subr.mxu0 0.0
      %583 = vmatpush1.msra.mxu0 0.0
      %584 = vmatprep.subr.mxu0 0.0
      %585 = vmatpush1.msra.mxu0 0.0
      %586 = vmatprep.subr.mxu0 0.0
      %587 = vmatpush1.msra.mxu0 0.0
      %588 = vmatprep.subr.mxu0 0.0
      %589 = vmatpush1.msra.mxu0 0.0
      %590 = vmatprep.subr.mxu0 0.0
      %591 = vmatpush1.msra.mxu0 0.0
      %592 = vmatprep.subr.mxu0 0.0
      %593 = vmatpush1.msra.mxu0 0.0
      %594 = vmatprep.subr.mxu0 0.0
      %595 = vmatpush1.msra.mxu0 0.0
      %596 = vmatprep.mubr.f32.mxu0 0.0
      %597 = vmatmul.mubr.f32.gmra.mrb[0].mxu0 %v527
      %v598 = vpop.f32.mrb[0].mxu0
      %v599 = vadd.f32 0.0, %v598
      %v600 = vpop.f32.mrb[0].mxu0
      %601 = vmatprep.mubr.f32.mxu0 0.0
      %602 = vmatmul.mubr.f32.gmra.mrb[0].mxu0 %v530
      %v603 = vpop.f32.mrb[0].mxu0
      %v604 = vadd.f32 0.0, %v603
      %v605 = vpop.f32.mrb[0].mxu0
      %606 = vdwg.mxu0
      %vm607 = vcmask 261120
      %v609 = vsel %vm607, %v599, 0
      %v612 = vsel %vm607, %v604, 0
      %614 = vmatprep.subr.mxu0 %v420
      %615 = vmatpush1.msra.mxu0 %v419
      %616 = vmatprep.subr.mxu0 %v422
      %617 = vmatpush1.msra.mxu0 %v421
      %618 = vmatprep.subr.mxu0 %v424
      %619 = vmatpush1.msra.mxu0 %v423
      %620 = vmatprep.subr.mxu0 %v426
      %621 = vmatpush1.msra.mxu0 %v425
      %622 = vmatprep.subr.mxu0 0.0
      %623 = vmatpush1.msra.mxu0 0.0
      %624 = vmatprep.subr.mxu0 0.0
      %625 = vmatpush1.msra.mxu0 0.0
      %626 = vmatprep.subr.mxu0 0.0
      %627 = vmatpush1.msra.mxu0 0.0
      %628 = vmatprep.subr.mxu0 0.0
      %629 = vmatpush1.msra.mxu0 0.0
      %630 = vmatprep.subr.mxu0 0.0
      %631 = vmatpush1.msra.mxu0 0.0
      %632 = vmatprep.subr.mxu0 0.0
      %633 = vmatpush1.msra.mxu0 0.0
      %634 = vmatprep.subr.mxu0 0.0
      %635 = vmatpush1.msra.mxu0 0.0
      %636 = vmatprep.subr.mxu0 0.0
      %637 = vmatpush1.msra.mxu0 0.0
      %638 = vmatprep.subr.mxu0 0.0
      %639 = vmatpush1.msra.mxu0 0.0
      %640 = vmatprep.subr.mxu0 0.0
      %641 = vmatpush1.msra.mxu0 0.0
      %642 = vmatprep.subr.mxu0 0.0
      %643 = vmatpush1.msra.mxu0 0.0
      %644 = vmatprep.subr.mxu0 0.0
      %645 = vmatpush1.msra.mxu0 0.0
      %646 = vmatprep.subr.mxu0 0.0
      %647 = vmatpush1.msra.mxu0 0.0
      %648 = vmatprep.subr.mxu0 0.0
      %649 = vmatpush1.msra.mxu0 0.0
      %650 = vmatprep.subr.mxu0 0.0
      %651 = vmatpush1.msra.mxu0 0.0
      %652 = vmatprep.subr.mxu0 0.0
      %653 = vmatpush1.msra.mxu0 0.0
      %654 = vmatprep.subr.mxu0 0.0
      %655 = vmatpush1.msra.mxu0 0.0
      %656 = vmatprep.subr.mxu0 0.0
      %657 = vmatpush1.msra.mxu0 0.0
      %658 = vmatprep.subr.mxu0 0.0
      %659 = vmatpush1.msra.mxu0 0.0
      %660 = vmatprep.subr.mxu0 0.0
      %661 = vmatpush1.msra.mxu0 0.0
      %662 = vmatprep.subr.mxu0 0.0
      %663 = vmatpush1.msra.mxu0 0.0
      %664 = vmatprep.subr.mxu0 0.0
      %665 = vmatpush1.msra.mxu0 0.0
      %666 = vmatprep.subr.mxu0 0.0
      %667 = vmatpush1.msra.mxu0 0.0
      %668 = vmatprep.subr.mxu0 0.0
      %669 = vmatpush1.msra.mxu0 0.0
      %670 = vmatprep.subr.mxu0 0.0
      %671 = vmatpush1.msra.mxu0 0.0
      %672 = vmatprep.subr.mxu0 0.0
      %673 = vmatpush1.msra.mxu0 0.0
      %674 = vmatprep.subr.mxu0 0.0
      %675 = vmatpush1.msra.mxu0 0.0
      %676 = vmatprep.subr.mxu0 0.0
      %677 = vmatpush1.msra.mxu0 0.0
      %678 = vmatprep.mubr.f32.mxu0 0.0
      %679 = vmatmul.mubr.f32.gmra.mrb[0].mxu0 %v609
      %v680 = vpop.f32.mrb[0].mxu0
      %v681 = vadd.f32 0.0, %v680
      %v682 = vpop.f32.mrb[0].mxu0
      %v683 = vadd.f32 0.0, %v682
      %684 = vmatprep.mubr.f32.mxu0 0.0
      %685 = vmatmul.mubr.f32.gmra.mrb[0].mxu0 %v612
      %v686 = vpop.f32.mrb[0].mxu0
      %v687 = vadd.f32 0.0, %v686
      %v688 = vpop.f32.mrb[0].mxu0
      %v689 = vadd.f32 0.0, %v688
      %690 = vdwg.mxu0
      %v692 = vsel %vm607, %v513, 0
      %v695 = vsel %vm607, %v518, 0
      %697 = vmatprep.subr.mxu0 %v412
      %698 = vmatpush1.msra.mxu0 %v411
      %699 = vmatprep.subr.mxu0 %v414
      %700 = vmatpush1.msra.mxu0 %v413
      %701 = vmatprep.subr.mxu0 %v416
      %702 = vmatpush1.msra.mxu0 %v415
      %703 = vmatprep.subr.mxu0 %v418
      %704 = vmatpush1.msra.mxu0 %v417
      %705 = vmatprep.subr.mxu0 0.0
      %706 = vmatpush1.msra.mxu0 0.0
      %707 = vmatprep.subr.mxu0 0.0
      %708 = vmatpush1.msra.mxu0 0.0
      %709 = vmatprep.subr.mxu0 0.0
      %710 = vmatpush1.msra.mxu0 0.0
      %711 = vmatprep.subr.mxu0 0.0
      %712 = vmatpush1.msra.mxu0 0.0
      %713 = vmatprep.subr.mxu0 0.0
      %714 = vmatpush1.msra.mxu0 0.0
      %715 = vmatprep.subr.mxu0 0.0
      %716 = vmatpush1.msra.mxu0 0.0
      %717 = vmatprep.subr.mxu0 0.0
      %718 = vmatpush1.msra.mxu0 0.0
      %719 = vmatprep.subr.mxu0 0.0
      %720 = vmatpush1.msra.mxu0 0.0
      %721 = vmatprep.subr.mxu0 0.0
      %722 = vmatpush1.msra.mxu0 0.0
      %723 = vmatprep.subr.mxu0 0.0
      %724 = vmatpush1.msra.mxu0 0.0
      %725 = vmatprep.subr.mxu0 0.0
      %726 = vmatpush1.msra.mxu0 0.0
      %727 = vmatprep.subr.mxu0 0.0
      %728 = vmatpush1.msra.mxu0 0.0
      %729 = vmatprep.subr.mxu0 0.0
      %730 = vmatpush1.msra.mxu0 0.0
      %731 = vmatprep.subr.mxu0 0.0
      %732 = vmatpush1.msra.mxu0 0.0
      %733 = vmatprep.subr.mxu0 0.0
      %734 = vmatpush1.msra.mxu0 0.0
      %735 = vmatprep.subr.mxu0 0.0
      %736 = vmatpush1.msra.mxu0 0.0
      %737 = vmatprep.subr.mxu0 0.0
      %738 = vmatpush1.msra.mxu0 0.0
      %739 = vmatprep.subr.mxu0 0.0
      %740 = vmatpush1.msra.mxu0 0.0
      %741 = vmatprep.subr.mxu0 0.0
      %742 = vmatpush1.msra.mxu0 0.0
      %743 = vmatprep.subr.mxu0 0.0
      %744 = vmatpush1.msra.mxu0 0.0
      %745 = vmatprep.subr.mxu0 0.0
      %746 = vmatpush1.msra.mxu0 0.0
      %747 = vmatprep.subr.mxu0 0.0
      %748 = vmatpush1.msra.mxu0 0.0
      %749 = vmatprep.subr.mxu0 0.0
      %750 = vmatpush1.msra.mxu0 0.0
      %751 = vmatprep.subr.mxu0 0.0
      %752 = vmatpush1.msra.mxu0 0.0
      %753 = vmatprep.subr.mxu0 0.0
      %754 = vmatpush1.msra.mxu0 0.0
      %755 = vmatprep.subr.mxu0 0.0
      %756 = vmatpush1.msra.mxu0 0.0
      %757 = vmatprep.subr.mxu0 0.0
      %758 = vmatpush1.msra.mxu0 0.0
      %759 = vmatprep.subr.mxu0 0.0
      %760 = vmatpush1.msra.mxu0 0.0
      %761 = vmatprep.mubr.f32.mxu0 0.0
      %762 = vmatmul.mubr.f32.gmra.mrb[0].mxu0 %v692
      %v763 = vpop.f32.mrb[0].mxu0
      %v764 = vadd.f32 %v681, %v763
      %v765 = vpop.f32.mrb[0].mxu0
      %v766 = vadd.f32 %v683, %v765
      %767 = vmatprep.mubr.f32.mxu0 0.0
      %768 = vmatmul.mubr.f32.gmra.mrb[0].mxu0 %v695
      %v769 = vpop.f32.mrb[0].mxu0
      %v770 = vadd.f32 %v687, %v769
      %v771 = vpop.f32.mrb[0].mxu0
      %v772 = vadd.f32 %v689, %v771
      %773 = vdwg.mxu0
      %s774 = scalar_lea.vmem %s2, 32
      %v775 = vld [vmem:[%s774] sm:$0xff]
      %v776 = vld [vmem:[%s774 + $0x8] sm:$0xff]
      %v777 = vmul.f32 %v775, %v409
      %v778 = vmul.f32 %v776, %v410
      %v780 = vsel %vm439, %v777, 0
      %v783 = vsel %vm439, %v778, 0
      %785 = vmatprep.subr.mxu0 0.0
      %786 = vmatpush1.msra.mxu0 %v407
      %787 = vmatprep.subr.mxu0 0.0
      %788 = vmatpush1.msra.mxu0 %v408
      %789 = vmatprep.subr.mxu0 0.0
      %790 = vmatpush1.msra.mxu0 0.0
      %791 = vmatprep.subr.mxu0 0.0
      %792 = vmatpush1.msra.mxu0 0.0
      %793 = vmatprep.subr.mxu0 0.0
      %794 = vmatpush1.msra.mxu0 0.0
      %795 = vmatprep.subr.mxu0 0.0
      %796 = vmatpush1.msra.mxu0 0.0
      %797 = vmatprep.subr.mxu0 0.0
      %798 = vmatpush1.msra.mxu0 0.0
      %799 = vmatprep.subr.mxu0 0.0
      %800 = vmatpush1.msra.mxu0 0.0
      %801 = vmatprep.subr.mxu0 0.0
      %802 = vmatpush1.msra.mxu0 0.0
      %803 = vmatprep.subr.mxu0 0.0
      %804 = vmatpush1.msra.mxu0 0.0
      %805 = vmatprep.subr.mxu0 0.0
      %806 = vmatpush1.msra.mxu0 0.0
      %807 = vmatprep.subr.mxu0 0.0
      %808 = vmatpush1.msra.mxu0 0.0
      %809 = vmatprep.subr.mxu0 0.0
      %810 = vmatpush1.msra.mxu0 0.0
      %811 = vmatprep.subr.mxu0 0.0
      %812 = vmatpush1.msra.mxu0 0.0
      %813 = vmatprep.subr.mxu0 0.0
      %814 = vmatpush1.msra.mxu0 0.0
      %815 = vmatprep.subr.mxu0 0.0
      %816 = vmatpush1.msra.mxu0 0.0
      %817 = vmatprep.subr.mxu0 0.0
      %818 = vmatpush1.msra.mxu0 0.0
      %819 = vmatprep.subr.mxu0 0.0
      %820 = vmatpush1.msra.mxu0 0.0
      %821 = vmatprep.subr.mxu0 0.0
      %822 = vmatpush1.msra.mxu0 0.0
      %823 = vmatprep.subr.mxu0 0.0
      %824 = vmatpush1.msra.mxu0 0.0
      %825 = vmatprep.subr.mxu0 0.0
      %826 = vmatpush1.msra.mxu0 0.0
      %827 = vmatprep.subr.mxu0 0.0
      %828 = vmatpush1.msra.mxu0 0.0
      %829 = vmatprep.subr.mxu0 0.0
      %830 = vmatpush1.msra.mxu0 0.0
      %831 = vmatprep.subr.mxu0 0.0
      %832 = vmatpush1.msra.mxu0 0.0
      %833 = vmatprep.subr.mxu0 0.0
      %834 = vmatpush1.msra.mxu0 0.0
      %835 = vmatprep.subr.mxu0 0.0
      %836 = vmatpush1.msra.mxu0 0.0
      %837 = vmatprep.subr.mxu0 0.0
      %838 = vmatpush1.msra.mxu0 0.0
      %839 = vmatprep.subr.mxu0 0.0
      %840 = vmatpush1.msra.mxu0 0.0
      %841 = vmatprep.subr.mxu0 0.0
      %842 = vmatpush1.msra.mxu0 0.0
      %843 = vmatprep.subr.mxu0 0.0
      %844 = vmatpush1.msra.mxu0 0.0
      %845 = vmatprep.subr.mxu0 0.0
      %846 = vmatpush1.msra.mxu0 0.0
      %847 = vmatprep.subr.mxu0 0.0
      %848 = vmatpush1.msra.mxu0 0.0
      %849 = vmatprep.mubr.f32.mxu0 0.0
      %850 = vmatmul.mubr.f32.gmra.mrb[0].mxu0 %v780
      %v851 = vpop.f32.mrb[0].mxu0
      %v852 = vadd.f32 0.0, %v851
      %v853 = vpop.f32.mrb[0].mxu0
      %854 = vmatprep.mubr.f32.mxu0 0.0
      %855 = vmatmul.mubr.f32.gmra.mrb[0].mxu0 %v783
      %v856 = vpop.f32.mrb[0].mxu0
      %v857 = vadd.f32 0.0, %v856
      %v858 = vpop.f32.mrb[0].mxu0
      %859 = vdwg.mxu0
      %v861 = vsel %vm607, %v852, 0
      %v864 = vsel %vm607, %v857, 0
      %866 = vmatprep.subr.mxu0 %v428
      %867 = vmatpush1.msra.mxu0 %v427
      %868 = vmatprep.subr.mxu0 %v430
      %869 = vmatpush1.msra.mxu0 %v429
      %870 = vmatprep.subr.mxu0 %v432
      %871 = vmatpush1.msra.mxu0 %v431
      %872 = vmatprep.subr.mxu0 %v434
      %873 = vmatpush1.msra.mxu0 %v433
      %874 = vmatprep.subr.mxu0 0.0
      %875 = vmatpush1.msra.mxu0 0.0
      %876 = vmatprep.subr.mxu0 0.0
      %877 = vmatpush1.msra.mxu0 0.0
      %878 = vmatprep.subr.mxu0 0.0
      %879 = vmatpush1.msra.mxu0 0.0
      %880 = vmatprep.subr.mxu0 0.0
      %881 = vmatpush1.msra.mxu0 0.0
      %882 = vmatprep.subr.mxu0 0.0
      %883 = vmatpush1.msra.mxu0 0.0
      %884 = vmatprep.subr.mxu0 0.0
      %885 = vmatpush1.msra.mxu0 0.0
      %886 = vmatprep.subr.mxu0 0.0
      %887 = vmatpush1.msra.mxu0 0.0
      %888 = vmatprep.subr.mxu0 0.0
      %889 = vmatpush1.msra.mxu0 0.0
      %890 = vmatprep.subr.mxu0 0.0
      %891 = vmatpush1.msra.mxu0 0.0
      %892 = vmatprep.subr.mxu0 0.0
      %893 = vmatpush1.msra.mxu0 0.0
      %894 = vmatprep.subr.mxu0 0.0
      %895 = vmatpush1.msra.mxu0 0.0
      %896 = vmatprep.subr.mxu0 0.0
      %897 = vmatpush1.msra.mxu0 0.0
      %898 = vmatprep.subr.mxu0 0.0
      %899 = vmatpush1.msra.mxu0 0.0
      %900 = vmatprep.subr.mxu0 0.0
      %901 = vmatpush1.msra.mxu0 0.0
      %902 = vmatprep.subr.mxu0 0.0
      %903 = vmatpush1.msra.mxu0 0.0
      %904 = vmatprep.subr.mxu0 0.0
      %905 = vmatpush1.msra.mxu0 0.0
      %906 = vmatprep.subr.mxu0 0.0
      %907 = vmatpush1.msra.mxu0 0.0
      %908 = vmatprep.subr.mxu0 0.0
      %909 = vmatpush1.msra.mxu0 0.0
      %910 = vmatprep.subr.mxu0 0.0
      %911 = vmatpush1.msra.mxu0 0.0
      %912 = vmatprep.subr.mxu0 0.0
      %913 = vmatpush1.msra.mxu0 0.0
      %914 = vmatprep.subr.mxu0 0.0
      %915 = vmatpush1.msra.mxu0 0.0
      %916 = vmatprep.subr.mxu0 0.0
      %917 = vmatpush1.msra.mxu0 0.0
      %918 = vmatprep.subr.mxu0 0.0
      %919 = vmatpush1.msra.mxu0 0.0
      %920 = vmatprep.subr.mxu0 0.0
      %921 = vmatpush1.msra.mxu0 0.0
      %922 = vmatprep.subr.mxu0 0.0
      %923 = vmatpush1.msra.mxu0 0.0
      %924 = vmatprep.subr.mxu0 0.0
      %925 = vmatpush1.msra.mxu0 0.0
      %926 = vmatprep.subr.mxu0 0.0
      %927 = vmatpush1.msra.mxu0 0.0
      %928 = vmatprep.subr.mxu0 0.0
      %929 = vmatpush1.msra.mxu0 0.0
      %930 = vmatprep.mubr.f32.mxu0 0.0
      %931 = vmatmul.mubr.f32.gmra.mrb[0].mxu0 %v861
      %v932 = vpop.f32.mrb[0].mxu0
      %v933 = vadd.f32 0.0, %v932
      %v934 = vpop.f32.mrb[0].mxu0
      %v935 = vadd.f32 0.0, %v934
      %936 = vmatprep.mubr.f32.mxu0 0.0
      %937 = vmatmul.mubr.f32.gmra.mrb[0].mxu0 %v864
      %v938 = vpop.f32.mrb[0].mxu0
      %v939 = vadd.f32 0.0, %v938
      %v940 = vpop.f32.mrb[0].mxu0
      %v941 = vadd.f32 0.0, %v940
      %942 = vdwg.mxu0
      %v943 = vadd.f32 %v764, %v933
      %v944 = vadd.f32 %v766, %v935
      %v945 = vadd.f32 %v770, %v939
      %v946 = vadd.f32 %v772, %v941
      %v947 = vmax.f32 %v943, 0.0
      %v948 = vmax.f32 %v944, 0.0
      %v949 = vmax.f32 %v945, 0.0
      %v950 = vmax.f32 %v946, 0.0
      %v951 = vld [vmem:[%s4] sm:$0xff]
      %v952 = vld [vmem:[%s4 + $0x8] sm:$0xff]
      %v953 = vld [vmem:[%s4 + $0x10] sm:$0xff]
      %v954 = vld [vmem:[%s4 + $0x18] sm:$0xff]
      %v955 = vld [vmem:[%s4 + $0x20] sm:$0xff]
      %v956 = vld [vmem:[%s4 + $0x28] sm:$0xff]
      %v957 = vld [vmem:[%s4 + $0x30] sm:$0xff]
      %v958 = vld [vmem:[%s4 + $0x38] sm:$0xff]
      %v959 = vld [vmem:[%s4 + $0x40] sm:$0xff]
      %v960 = vld [vmem:[%s4 + $0x48] sm:$0xff]
      %v961 = vld [vmem:[%s4 + $0x50] sm:$0xff]
      %v962 = vld [vmem:[%s4 + $0x58] sm:$0xff]
      %v963 = vld [vmem:[%s4 + $0x60] sm:$0xff]
      %v964 = vld [vmem:[%s4 + $0x68] sm:$0xff]
      %v965 = vld [vmem:[%s4 + $0x70] sm:$0xff]
      %v966 = vld [vmem:[%s4 + $0x78] sm:$0xff]
      %v967 = vld [vmem:[%s4 + $0x80] sm:$0xff]
      %v968 = vld [vmem:[%s4 + $0x88] sm:$0xff]
      %v969 = vld [vmem:[%s4 + $0x90] sm:$0xff]
      %v970 = vld [vmem:[%s4 + $0x98] sm:$0xff]
      %v971 = vld [vmem:[%s4 + $0xa0] sm:$0xff]
      %v972 = vld [vmem:[%s4 + $0xa8] sm:$0xff]
      %v973 = vld [vmem:[%s4 + $0xb0] sm:$0xff]
      %v974 = vld [vmem:[%s4 + $0xb8] sm:$0xff]
      %v975 = vld [vmem:[%s4 + $0xc0] sm:$0xff]
      %v976 = vld [vmem:[%s4 + $0xc8] sm:$0xff]
      %v977 = vld [vmem:[%s4 + $0xd0] sm:$0xff]
      %v978 = vld [vmem:[%s4 + $0xd8] sm:$0xff]
      %v979 = vld [vmem:[%s4 + $0xe0] sm:$0xff]
      %v980 = vld [vmem:[%s4 + $0xe8] sm:$0xff]
      %v981 = vld [vmem:[%s4 + $0xf0] sm:$0xff]
      %v982 = vld [vmem:[%s4 + $0xf8] sm:$0xff]
      %v983 = vld [vmem:[%s4 + $0x100] sm:$0xff]
      %v984 = vld [vmem:[%s4 + $0x108] sm:$0xff]
      %v985 = vld [vmem:[%s4 + $0x110] sm:$0xff]
      %v986 = vld [vmem:[%s4 + $0x118] sm:$0xff]
      %v987 = vld [vmem:[%s4 + $0x120] sm:$0xff]
      %v988 = vld [vmem:[%s4 + $0x128] sm:$0xff]
      %v989 = vld [vmem:[%s4 + $0x130] sm:$0xff]
      %v990 = vld [vmem:[%s4 + $0x138] sm:$0xff]
      %v991 = vld [vmem:[%s4 + $0x140] sm:$0xff]
      %v992 = vld [vmem:[%s4 + $0x148] sm:$0xff]
      %v993 = vld [vmem:[%s4 + $0x150] sm:$0xff]
      %v994 = vld [vmem:[%s4 + $0x158] sm:$0xff]
      %v995 = vld [vmem:[%s4 + $0x160] sm:$0xff]
      %v996 = vld [vmem:[%s4 + $0x168] sm:$0xff]
      %v997 = vld [vmem:[%s4 + $0x170] sm:$0xff]
      %v998 = vld [vmem:[%s4 + $0x178] sm:$0xff]
      %v999 = vld [vmem:[%s4 + $0x180] sm:$0xff]
      %v1000 = vld [vmem:[%s4 + $0x188] sm:$0xff]
      %v1001 = vld [vmem:[%s4 + $0x190] sm:$0xff]
      %v1002 = vld [vmem:[%s4 + $0x198] sm:$0xff]
      %v1003 = vld [vmem:[%s4 + $0x1a0] sm:$0xff]
      %v1004 = vld [vmem:[%s4 + $0x1a8] sm:$0xff]
      %v1005 = vld [vmem:[%s4 + $0x1b0] sm:$0xff]
      %v1006 = vld [vmem:[%s4 + $0x1b8] sm:$0xff]
      %v1007 = vld [vmem:[%s4 + $0x1c0] sm:$0xff]
      %v1008 = vld [vmem:[%s4 + $0x1c8] sm:$0xff]
      %v1009 = vld [vmem:[%s4 + $0x1d0] sm:$0xff]
      %v1010 = vld [vmem:[%s4 + $0x1d8] sm:$0xff]
      %v1011 = vld [vmem:[%s4 + $0x1e0] sm:$0xff]
      %v1012 = vld [vmem:[%s4 + $0x1e8] sm:$0xff]
      %v1013 = vld [vmem:[%s4 + $0x1f0] sm:$0xff]
      %v1014 = vld [vmem:[%s4 + $0x1f8] sm:$0xff]
      %v1015 = vld [vmem:[%s5] sm:$0xff]
      %v1016 = vld [vmem:[%s5 + $0x8] sm:$0xff]
      %v1017 = vld [vmem:[%s5 + $0x10] sm:$0xff]
      %v1018 = vld [vmem:[%s5 + $0x18] sm:$0xff]
      %v1019 = vld [vmem:[%s5 + $0x20] sm:$0xff]
      %v1020 = vld [vmem:[%s5 + $0x28] sm:$0xff]
      %v1021 = vld [vmem:[%s5 + $0x30] sm:$0xff]
      %v1022 = vld [vmem:[%s5 + $0x38] sm:$0xff]
      %v1024 = vsel %vm607, %v407, 0
      %v1027 = vsel %vm607, %v408, 0
      %1029 = vmatprep.subr.mxu0 %v1016
      %1030 = vmatpush1.msra.mxu0 %v1015
      %1031 = vmatprep.subr.mxu0 %v1018
      %1032 = vmatpush1.msra.mxu0 %v1017
      %1033 = vmatprep.subr.mxu0 %v1020
      %1034 = vmatpush1.msra.mxu0 %v1019
      %1035 = vmatprep.subr.mxu0 %v1022
      %1036 = vmatpush1.msra.mxu0 %v1021
      %1037 = vmatprep.subr.mxu0 0.0
      %1038 = vmatpush1.msra.mxu0 0.0
      %1039 = vmatprep.subr.mxu0 0.0
      %1040 = vmatpush1.msra.mxu0 0.0
      %1041 = vmatprep.subr.mxu0 0.0
      %1042 = vmatpush1.msra.mxu0 0.0
      %1043 = vmatprep.subr.mxu0 0.0
      %1044 = vmatpush1.msra.mxu0 0.0
      %1045 = vmatprep.subr.mxu0 0.0
      %1046 = vmatpush1.msra.mxu0 0.0
      %1047 = vmatprep.subr.mxu0 0.0
      %1048 = vmatpush1.msra.mxu0 0.0
      %1049 = vmatprep.subr.mxu0 0.0
      %1050 = vmatpush1.msra.mxu0 0.0
      %1051 = vmatprep.subr.mxu0 0.0
      %1052 = vmatpush1.msra.mxu0 0.0
      %1053 = vmatprep.subr.mxu0 0.0
      %1054 = vmatpush1.msra.mxu0 0.0
      %1055 = vmatprep.subr.mxu0 0.0
      %1056 = vmatpush1.msra.mxu0 0.0
      %1057 = vmatprep.subr.mxu0 0.0
      %1058 = vmatpush1.msra.mxu0 0.0
      %1059 = vmatprep.subr.mxu0 0.0
      %1060 = vmatpush1.msra.mxu0 0.0
      %1061 = vmatprep.subr.mxu0 0.0
      %1062 = vmatpush1.msra.mxu0 0.0
      %1063 = vmatprep.subr.mxu0 0.0
      %1064 = vmatpush1.msra.mxu0 0.0
      %1065 = vmatprep.subr.mxu0 0.0
      %1066 = vmatpush1.msra.mxu0 0.0
      %1067 = vmatprep.subr.mxu0 0.0
      %1068 = vmatpush1.msra.mxu0 0.0
      %1069 = vmatprep.subr.mxu0 0.0
      %1070 = vmatpush1.msra.mxu0 0.0
      %1071 = vmatprep.subr.mxu0 0.0
      %1072 = vmatpush1.msra.mxu0 0.0
      %1073 = vmatprep.subr.mxu0 0.0
      %1074 = vmatpush1.msra.mxu0 0.0
      %1075 = vmatprep.subr.mxu0 0.0
      %1076 = vmatpush1.msra.mxu0 0.0
      %1077 = vmatprep.subr.mxu0 0.0
      %1078 = vmatpush1.msra.mxu0 0.0
      %1079 = vmatprep.subr.mxu0 0.0
      %1080 = vmatpush1.msra.mxu0 0.0
      %1081 = vmatprep.subr.mxu0 0.0
      %1082 = vmatpush1.msra.mxu0 0.0
      %1083 = vmatprep.subr.mxu0 0.0
      %1084 = vmatpush1.msra.mxu0 0.0
      %1085 = vmatprep.subr.mxu0 0.0
      %1086 = vmatpush1.msra.mxu0 0.0
      %1087 = vmatprep.subr.mxu0 0.0
      %1088 = vmatpush1.msra.mxu0 0.0
      %1089 = vmatprep.subr.mxu0 0.0
      %1090 = vmatpush1.msra.mxu0 0.0
      %1091 = vmatprep.subr.mxu0 0.0
      %1092 = vmatpush1.msra.mxu0 0.0
      %1093 = vmatprep.mubr.f32.mxu0 0.0
      %1094 = vmatmul.mubr.f32.gmra.mrb[0].mxu0 %v1024
      %v1095 = vpop.f32.mrb[0].mxu0
      %v1096 = vadd.f32 0.0, %v1095
      %v1097 = vpop.f32.mrb[0].mxu0
      %v1098 = vadd.f32 0.0, %v1097
      %1099 = vmatprep.mubr.f32.mxu0 0.0
      %1100 = vmatmul.mubr.f32.gmra.mrb[0].mxu0 %v1027
      %v1101 = vpop.f32.mrb[0].mxu0
      %v1102 = vadd.f32 0.0, %v1101
      %v1103 = vpop.f32.mrb[0].mxu0
      %v1104 = vadd.f32 0.0, %v1103
      %1105 = vdwg.mxu0
      %1106 = vmatprep.subr.mxu0 %v952
      %1107 = vmatpush1.msra.mxu0 %v951
      %1108 = vmatprep.subr.mxu0 %v954
      %1109 = vmatpush1.msra.mxu0 %v953
      %1110 = vmatprep.subr.mxu0 %v956
      %1111 = vmatpush1.msra.mxu0 %v955
      %1112 = vmatprep.subr.mxu0 %v958
      %1113 = vmatpush1.msra.mxu0 %v957
      %1114 = vmatprep.subr.mxu0 %v960
      %1115 = vmatpush1.msra.mxu0 %v959
      %1116 = vmatprep.subr.mxu0 %v962
      %1117 = vmatpush1.msra.mxu0 %v961
      %1118 = vmatprep.subr.mxu0 %v964
      %1119 = vmatpush1.msra.mxu0 %v963
      %1120 = vmatprep.subr.mxu0 %v966
      %1121 = vmatpush1.msra.mxu0 %v965
      %1122 = vmatprep.subr.mxu0 %v968
      %1123 = vmatpush1.msra.mxu0 %v967
      %1124 = vmatprep.subr.mxu0 %v970
      %1125 = vmatpush1.msra.mxu0 %v969
      %1126 = vmatprep.subr.mxu0 %v972
      %1127 = vmatpush1.msra.mxu0 %v971
      %1128 = vmatprep.subr.mxu0 %v974
      %1129 = vmatpush1.msra.mxu0 %v973
      %1130 = vmatprep.subr.mxu0 %v976
      %1131 = vmatpush1.msra.mxu0 %v975
      %1132 = vmatprep.subr.mxu0 %v978
      %1133 = vmatpush1.msra.mxu0 %v977
      %1134 = vmatprep.subr.mxu0 %v980
      %1135 = vmatpush1.msra.mxu0 %v979
      %1136 = vmatprep.subr.mxu0 %v982
      %1137 = vmatpush1.msra.mxu0 %v981
      %1138 = vmatprep.subr.mxu0 %v984
      %1139 = vmatpush1.msra.mxu0 %v983
      %1140 = vmatprep.subr.mxu0 %v986
      %1141 = vmatpush1.msra.mxu0 %v985
      %1142 = vmatprep.subr.mxu0 %v988
      %1143 = vmatpush1.msra.mxu0 %v987
      %1144 = vmatprep.subr.mxu0 %v990
      %1145 = vmatpush1.msra.mxu0 %v989
      %1146 = vmatprep.subr.mxu0 %v992
      %1147 = vmatpush1.msra.mxu0 %v991
      %1148 = vmatprep.subr.mxu0 %v994
      %1149 = vmatpush1.msra.mxu0 %v993
      %1150 = vmatprep.subr.mxu0 %v996
      %1151 = vmatpush1.msra.mxu0 %v995
      %1152 = vmatprep.subr.mxu0 %v998
      %1153 = vmatpush1.msra.mxu0 %v997
      %1154 = vmatprep.subr.mxu0 %v1000
      %1155 = vmatpush1.msra.mxu0 %v999
      %1156 = vmatprep.subr.mxu0 %v1002
      %1157 = vmatpush1.msra.mxu0 %v1001
      %1158 = vmatprep.subr.mxu0 %v1004
      %1159 = vmatpush1.msra.mxu0 %v1003
      %1160 = vmatprep.subr.mxu0 %v1006
      %1161 = vmatpush1.msra.mxu0 %v1005
      %1162 = vmatprep.subr.mxu0 %v1008
      %1163 = vmatpush1.msra.mxu0 %v1007
      %1164 = vmatprep.subr.mxu0 %v1010
      %1165 = vmatpush1.msra.mxu0 %v1009
      %1166 = vmatprep.subr.mxu0 %v1012
      %1167 = vmatpush1.msra.mxu0 %v1011
      %1168 = vmatprep.subr.mxu0 %v1014
      %1169 = vmatpush1.msra.mxu0 %v1013
      %1170 = vmatprep.mubr.f32.mxu0 %v948
      %1171 = vmatmul.mubr.f32.gmra.mrb[0].mxu0 %v947
      %v1172 = vpop.f32.mrb[0].mxu0
      %v1173 = vadd.f32 %v1096, %v1172
      %v1174 = vpop.f32.mrb[0].mxu0
      %v1175 = vadd.f32 %v1098, %v1174
      %1176 = vmatprep.mubr.f32.mxu0 %v950
      %1177 = vmatmul.mubr.f32.gmra.mrb[0].mxu0 %v949
      %v1178 = vpop.f32.mrb[0].mxu0
      %v1179 = vadd.f32 %v1102, %v1178
      %v1180 = vpop.f32.mrb[0].mxu0
      %v1181 = vadd.f32 %v1104, %v1180
      %1182 = vdwg.mxu0
      %v1183 = vld [vmem:[%s6] sm:$0x3]
      %v1185 = vlaneseq
      %v1186 = vshrl.u32 %v1185, 7
      %v1187 = vsub.s32 0, %v1186
      %v1188 = vrot.slane %v1183, %v1187
      %v1189 = vlaneseq
      %v1190 = vshrl.u32 %v1189, 7
      %v1191 = vsub.s32 1, %v1190
      %v1192 = vrot.slane %v1183, %v1191
      %v1195 = vadd.f32 %v1173, %v1188
      %v1196 = vadd.f32 %v1175, %v1192
      %v1197 = vadd.f32 %v1179, %v1188
      %v1198 = vadd.f32 %v1181, %v1192
      %v1199 = vmax.f32 %v1195, 0.0
      %v1200 = vmax.f32 %v1196, 0.0
      %v1201 = vmax.f32 %v1197, 0.0
      %v1202 = vmax.f32 %v1198, 0.0
      %v1203 = vld [vmem:[%s9] sm:$0xff]
      %v1204 = vld [vmem:[%s9 + $0x8] sm:$0xff]
      %v1205 = vld [vmem:[%s9 + $0x10] sm:$0xff]
      %v1206 = vld [vmem:[%s9 + $0x18] sm:$0xff]
      %v1207 = vld [vmem:[%s9 + $0x20] sm:$0xff]
      %v1208 = vld [vmem:[%s9 + $0x28] sm:$0xff]
      %v1209 = vld [vmem:[%s9 + $0x30] sm:$0xff]
      %v1210 = vld [vmem:[%s9 + $0x38] sm:$0xff]
      %v1211 = vld [vmem:[%s9 + $0x40] sm:$0xff]
      %v1212 = vld [vmem:[%s9 + $0x48] sm:$0xff]
      %v1213 = vld [vmem:[%s9 + $0x50] sm:$0xff]
      %v1214 = vld [vmem:[%s9 + $0x58] sm:$0xff]
      %v1215 = vld [vmem:[%s9 + $0x60] sm:$0xff]
      %v1216 = vld [vmem:[%s9 + $0x68] sm:$0xff]
      %v1217 = vld [vmem:[%s9 + $0x70] sm:$0xff]
      %v1218 = vld [vmem:[%s9 + $0x78] sm:$0xff]
      %v1219 = vld [vmem:[%s9 + $0x80] sm:$0xff]
      %v1220 = vld [vmem:[%s9 + $0x88] sm:$0xff]
      %v1221 = vld [vmem:[%s9 + $0x90] sm:$0xff]
      %v1222 = vld [vmem:[%s9 + $0x98] sm:$0xff]
      %v1223 = vld [vmem:[%s9 + $0xa0] sm:$0xff]
      %v1224 = vld [vmem:[%s9 + $0xa8] sm:$0xff]
      %v1225 = vld [vmem:[%s9 + $0xb0] sm:$0xff]
      %v1226 = vld [vmem:[%s9 + $0xb8] sm:$0xff]
      %v1227 = vld [vmem:[%s9 + $0xc0] sm:$0xff]
      %v1228 = vld [vmem:[%s9 + $0xc8] sm:$0xff]
      %v1229 = vld [vmem:[%s9 + $0xd0] sm:$0xff]
      %v1230 = vld [vmem:[%s9 + $0xd8] sm:$0xff]
      %v1231 = vld [vmem:[%s9 + $0xe0] sm:$0xff]
      %v1232 = vld [vmem:[%s9 + $0xe8] sm:$0xff]
      %v1233 = vld [vmem:[%s9 + $0xf0] sm:$0xff]
      %v1234 = vld [vmem:[%s9 + $0xf8] sm:$0xff]
      %1235 = vmatprep.subr.mxu0 0.0
      %1236 = vmatpush1.msra.mxu0 %v1203
      %1237 = vmatprep.subr.mxu0 0.0
      %1238 = vmatpush1.msra.mxu0 %v1204
      %1239 = vmatprep.subr.mxu0 0.0
      %1240 = vmatpush1.msra.mxu0 %v1205
      %1241 = vmatprep.subr.mxu0 0.0
      %1242 = vmatpush1.msra.mxu0 %v1206
      %1243 = vmatprep.subr.mxu0 0.0
      %1244 = vmatpush1.msra.mxu0 %v1207
      %1245 = vmatprep.subr.mxu0 0.0
      %1246 = vmatpush1.msra.mxu0 %v1208
      %1247 = vmatprep.subr.mxu0 0.0
      %1248 = vmatpush1.msra.mxu0 %v1209
      %1249 = vmatprep.subr.mxu0 0.0
      %1250 = vmatpush1.msra.mxu0 %v1210
      %1251 = vmatprep.subr.mxu0 0.0
      %1252 = vmatpush1.msra.mxu0 %v1211
      %1253 = vmatprep.subr.mxu0 0.0
      %1254 = vmatpush1.msra.mxu0 %v1212
      %1255 = vmatprep.subr.mxu0 0.0
      %1256 = vmatpush1.msra.mxu0 %v1213
      %1257 = vmatprep.subr.mxu0 0.0
      %1258 = vmatpush1.msra.mxu0 %v1214
      %1259 = vmatprep.subr.mxu0 0.0
      %1260 = vmatpush1.msra.mxu0 %v1215
      %1261 = vmatprep.subr.mxu0 0.0
      %1262 = vmatpush1.msra.mxu0 %v1216
      %1263 = vmatprep.subr.mxu0 0.0
      %1264 = vmatpush1.msra.mxu0 %v1217
      %1265 = vmatprep.subr.mxu0 0.0
      %1266 = vmatpush1.msra.mxu0 %v1218
      %1267 = vmatprep.subr.mxu0 0.0
      %1268 = vmatpush1.msra.mxu0 %v1219
      %1269 = vmatprep.subr.mxu0 0.0
      %1270 = vmatpush1.msra.mxu0 %v1220
      %1271 = vmatprep.subr.mxu0 0.0
      %1272 = vmatpush1.msra.mxu0 %v1221
      %1273 = vmatprep.subr.mxu0 0.0
      %1274 = vmatpush1.msra.mxu0 %v1222
      %1275 = vmatprep.subr.mxu0 0.0
      %1276 = vmatpush1.msra.mxu0 %v1223
      %1277 = vmatprep.subr.mxu0 0.0
      %1278 = vmatpush1.msra.mxu0 %v1224
      %1279 = vmatprep.subr.mxu0 0.0
      %1280 = vmatpush1.msra.mxu0 %v1225
      %1281 = vmatprep.subr.mxu0 0.0
      %1282 = vmatpush1.msra.mxu0 %v1226
      %1283 = vmatprep.subr.mxu0 0.0
      %1284 = vmatpush1.msra.mxu0 %v1227
      %1285 = vmatprep.subr.mxu0 0.0
      %1286 = vmatpush1.msra.mxu0 %v1228
      %1287 = vmatprep.subr.mxu0 0.0
      %1288 = vmatpush1.msra.mxu0 %v1229
      %1289 = vmatprep.subr.mxu0 0.0
      %1290 = vmatpush1.msra.mxu0 %v1230
      %1291 = vmatprep.subr.mxu0 0.0
      %1292 = vmatpush1.msra.mxu0 %v1231
      %1293 = vmatprep.subr.mxu0 0.0
      %1294 = vmatpush1.msra.mxu0 %v1232
      %1295 = vmatprep.subr.mxu0 0.0
      %1296 = vmatpush1.msra.mxu0 %v1233
      %1297 = vmatprep.subr.mxu0 0.0
      %1298 = vmatpush1.msra.mxu0 %v1234
      %1299 = vmatprep.mubr.f32.mxu0 %v1200
      %1300 = vmatmul.mubr.f32.gmra.mrb[0].mxu0 %v1199
      %v1301 = vpop.f32.mrb[0].mxu0
      %v1302 = vadd.f32 0.0, %v1301
      %v1303 = vpop.f32.mrb[0].mxu0
      %1304 = vmatprep.mubr.f32.mxu0 %v1202
      %1305 = vmatmul.mubr.f32.gmra.mrb[0].mxu0 %v1201
      %v1306 = vpop.f32.mrb[0].mxu0
      %v1307 = vadd.f32 0.0, %v1306
      %v1308 = vpop.f32.mrb[0].mxu0
      %1309 = vdwg.mxu0
      %v1310 = vmul.f32 %v1199, %v1199
      %v1311 = vmul.f32 %v1200, %v1200
      %v1312 = vmul.f32 %v1201, %v1201
      %v1313 = vmul.f32 %v1202, %v1202
      %1314 = vmatprep.subr.mxu0 0.0
      %1315 = vmatpush1.msra.mxu0 %v1203
      %1316 = vmatprep.subr.mxu0 0.0
      %1317 = vmatpush1.msra.mxu0 %v1204
      %1318 = vmatprep.subr.mxu0 0.0
      %1319 = vmatpush1.msra.mxu0 %v1205
      %1320 = vmatprep.subr.mxu0 0.0
      %1321 = vmatpush1.msra.mxu0 %v1206
      %1322 = vmatprep.subr.mxu0 0.0
      %1323 = vmatpush1.msra.mxu0 %v1207
      %1324 = vmatprep.subr.mxu0 0.0
      %1325 = vmatpush1.msra.mxu0 %v1208
      %1326 = vmatprep.subr.mxu0 0.0
      %1327 = vmatpush1.msra.mxu0 %v1209
      %1328 = vmatprep.subr.mxu0 0.0
      %1329 = vmatpush1.msra.mxu0 %v1210
      %1330 = vmatprep.subr.mxu0 0.0
      %1331 = vmatpush1.msra.mxu0 %v1211
      %1332 = vmatprep.subr.mxu0 0.0
      %1333 = vmatpush1.msra.mxu0 %v1212
      %1334 = vmatprep.subr.mxu0 0.0
      %1335 = vmatpush1.msra.mxu0 %v1213
      %1336 = vmatprep.subr.mxu0 0.0
      %1337 = vmatpush1.msra.mxu0 %v1214
      %1338 = vmatprep.subr.mxu0 0.0
      %1339 = vmatpush1.msra.mxu0 %v1215
      %1340 = vmatprep.subr.mxu0 0.0
      %1341 = vmatpush1.msra.mxu0 %v1216
      %1342 = vmatprep.subr.mxu0 0.0
      %1343 = vmatpush1.msra.mxu0 %v1217
      %1344 = vmatprep.subr.mxu0 0.0
      %1345 = vmatpush1.msra.mxu0 %v1218
      %1346 = vmatprep.subr.mxu0 0.0
      %1347 = vmatpush1.msra.mxu0 %v1219
      %1348 = vmatprep.subr.mxu0 0.0
      %1349 = vmatpush1.msra.mxu0 %v1220
      %1350 = vmatprep.subr.mxu0 0.0
      %1351 = vmatpush1.msra.mxu0 %v1221
      %1352 = vmatprep.subr.mxu0 0.0
      %1353 = vmatpush1.msra.mxu0 %v1222
      %1354 = vmatprep.subr.mxu0 0.0
      %1355 = vmatpush1.msra.mxu0 %v1223
      %1356 = vmatprep.subr.mxu0 0.0
      %1357 = vmatpush1.msra.mxu0 %v1224
      %1358 = vmatprep.subr.mxu0 0.0
      %1359 = vmatpush1.msra.mxu0 %v1225
      %1360 = vmatprep.subr.mxu0 0.0
      %1361 = vmatpush1.msra.mxu0 %v1226
      %1362 = vmatprep.subr.mxu0 0.0
      %1363 = vmatpush1.msra.mxu0 %v1227
      %1364 = vmatprep.subr.mxu0 0.0
      %1365 = vmatpush1.msra.mxu0 %v1228
      %1366 = vmatprep.subr.mxu0 0.0
      %1367 = vmatpush1.msra.mxu0 %v1229
      %1368 = vmatprep.subr.mxu0 0.0
      %1369 = vmatpush1.msra.mxu0 %v1230
      %1370 = vmatprep.subr.mxu0 0.0
      %1371 = vmatpush1.msra.mxu0 %v1231
      %1372 = vmatprep.subr.mxu0 0.0
      %1373 = vmatpush1.msra.mxu0 %v1232
      %1374 = vmatprep.subr.mxu0 0.0
      %1375 = vmatpush1.msra.mxu0 %v1233
      %1376 = vmatprep.subr.mxu0 0.0
      %1377 = vmatpush1.msra.mxu0 %v1234
      %1378 = vmatprep.mubr.f32.mxu0 %v1311
      %1379 = vmatmul.mubr.f32.gmra.mrb[0].mxu0 %v1310
      %v1380 = vpop.f32.mrb[0].mxu0
      %v1381 = vadd.f32 0.0, %v1380
      %v1382 = vpop.f32.mrb[0].mxu0
      %1383 = vmatprep.mubr.f32.mxu0 %v1313
      %1384 = vmatmul.mubr.f32.gmra.mrb[0].mxu0 %v1312
      %v1385 = vpop.f32.mrb[0].mxu0
      %v1386 = vadd.f32 0.0, %v1385
      %v1387 = vpop.f32.mrb[0].mxu0
      %1388 = vdwg.mxu0
      %v1389 = vld [vmem:[%s10] sm:$0xff]
      %v1390 = vld [vmem:[%s10 + $0x8] sm:$0xff]
      %vm1391 = vcmask 64512
      %v1393 = vsel %vm1391, %v1302, 0
      %v1396 = vsel %vm1391, %v1307, 0
      %1398 = vmatprep.subr.mxu0 %v1390
      %1399 = vmatpush1.msra.mxu0 %v1389
      %1400 = vmatprep.subr.mxu0 0.0
      %1401 = vmatpush1.msra.mxu0 0.0
      %1402 = vmatprep.subr.mxu0 0.0
      %1403 = vmatpush1.msra.mxu0 0.0
      %1404 = vmatprep.subr.mxu0 0.0
      %1405 = vmatpush1.msra.mxu0 0.0
      %1406 = vmatprep.subr.mxu0 0.0
      %1407 = vmatpush1.msra.mxu0 0.0
      %1408 = vmatprep.subr.mxu0 0.0
      %1409 = vmatpush1.msra.mxu0 0.0
      %1410 = vmatprep.subr.mxu0 0.0
      %1411 = vmatpush1.msra.mxu0 0.0
      %1412 = vmatprep.subr.mxu0 0.0
      %1413 = vmatpush1.msra.mxu0 0.0
      %1414 = vmatprep.subr.mxu0 0.0
      %1415 = vmatpush1.msra.mxu0 0.0
      %1416 = vmatprep.subr.mxu0 0.0
      %1417 = vmatpush1.msra.mxu0 0.0
      %1418 = vmatprep.subr.mxu0 0.0
      %1419 = vmatpush1.msra.mxu0 0.0
      %1420 = vmatprep.subr.mxu0 0.0
      %1421 = vmatpush1.msra.mxu0 0.0
      %1422 = vmatprep.subr.mxu0 0.0
      %1423 = vmatpush1.msra.mxu0 0.0
      %1424 = vmatprep.subr.mxu0 0.0
      %1425 = vmatpush1.msra.mxu0 0.0
      %1426 = vmatprep.subr.mxu0 0.0
      %1427 = vmatpush1.msra.mxu0 0.0
      %1428 = vmatprep.subr.mxu0 0.0
      %1429 = vmatpush1.msra.mxu0 0.0
      %1430 = vmatprep.subr.mxu0 0.0
      %1431 = vmatpush1.msra.mxu0 0.0
      %1432 = vmatprep.subr.mxu0 0.0
      %1433 = vmatpush1.msra.mxu0 0.0
      %1434 = vmatprep.subr.mxu0 0.0
      %1435 = vmatpush1.msra.mxu0 0.0
      %1436 = vmatprep.subr.mxu0 0.0
      %1437 = vmatpush1.msra.mxu0 0.0
      %1438 = vmatprep.subr.mxu0 0.0
      %1439 = vmatpush1.msra.mxu0 0.0
      %1440 = vmatprep.subr.mxu0 0.0
      %1441 = vmatpush1.msra.mxu0 0.0
      %1442 = vmatprep.subr.mxu0 0.0
      %1443 = vmatpush1.msra.mxu0 0.0
      %1444 = vmatprep.subr.mxu0 0.0
      %1445 = vmatpush1.msra.mxu0 0.0
      %1446 = vmatprep.subr.mxu0 0.0
      %1447 = vmatpush1.msra.mxu0 0.0
      %1448 = vmatprep.subr.mxu0 0.0
      %1449 = vmatpush1.msra.mxu0 0.0
      %1450 = vmatprep.subr.mxu0 0.0
      %1451 = vmatpush1.msra.mxu0 0.0
      %1452 = vmatprep.subr.mxu0 0.0
      %1453 = vmatpush1.msra.mxu0 0.0
      %1454 = vmatprep.subr.mxu0 0.0
      %1455 = vmatpush1.msra.mxu0 0.0
      %1456 = vmatprep.subr.mxu0 0.0
      %1457 = vmatpush1.msra.mxu0 0.0
      %1458 = vmatprep.subr.mxu0 0.0
      %1459 = vmatpush1.msra.mxu0 0.0
      %1460 = vmatprep.subr.mxu0 0.0
      %1461 = vmatpush1.msra.mxu0 0.0
      %1462 = vmatprep.mubr.f32.mxu0 0.0
      %1463 = vmatmul.mubr.f32.gmra.mrb[0].mxu0 %v1393
      %v1464 = vpop.f32.mrb[0].mxu0
      %v1465 = vadd.f32 0.0, %v1464
      %v1466 = vpop.f32.mrb[0].mxu0
      %v1467 = vadd.f32 0.0, %v1466
      %1468 = vmatprep.mubr.f32.mxu0 0.0
      %1469 = vmatmul.mubr.f32.gmra.mrb[0].mxu0 %v1396
      %v1470 = vpop.f32.mrb[0].mxu0
      %v1471 = vadd.f32 0.0, %v1470
      %v1472 = vpop.f32.mrb[0].mxu0
      %v1473 = vadd.f32 0.0, %v1472
      %1474 = vdwg.mxu0
      %v1476 = vsel %vm1391, %v1381, 0
      %v1479 = vsel %vm1391, %v1386, 0
      %1481 = vmatprep.subr.mxu0 %v1390
      %1482 = vmatpush1.msra.mxu0 %v1389
      %1483 = vmatprep.subr.mxu0 0.0
      %1484 = vmatpush1.msra.mxu0 0.0
      %1485 = vmatprep.subr.mxu0 0.0
      %1486 = vmatpush1.msra.mxu0 0.0
      %1487 = vmatprep.subr.mxu0 0.0
      %1488 = vmatpush1.msra.mxu0 0.0
      %1489 = vmatprep.subr.mxu0 0.0
      %1490 = vmatpush1.msra.mxu0 0.0
      %1491 = vmatprep.subr.mxu0 0.0
      %1492 = vmatpush1.msra.mxu0 0.0
      %1493 = vmatprep.subr.mxu0 0.0
      %1494 = vmatpush1.msra.mxu0 0.0
      %1495 = vmatprep.subr.mxu0 0.0
      %1496 = vmatpush1.msra.mxu0 0.0
      %1497 = vmatprep.subr.mxu0 0.0
      %1498 = vmatpush1.msra.mxu0 0.0
      %1499 = vmatprep.subr.mxu0 0.0
      %1500 = vmatpush1.msra.mxu0 0.0
      %1501 = vmatprep.subr.mxu0 0.0
      %1502 = vmatpush1.msra.mxu0 0.0
      %1503 = vmatprep.subr.mxu0 0.0
      %1504 = vmatpush1.msra.mxu0 0.0
      %1505 = vmatprep.subr.mxu0 0.0
      %1506 = vmatpush1.msra.mxu0 0.0
      %1507 = vmatprep.subr.mxu0 0.0
      %1508 = vmatpush1.msra.mxu0 0.0
      %1509 = vmatprep.subr.mxu0 0.0
      %1510 = vmatpush1.msra.mxu0 0.0
      %1511 = vmatprep.subr.mxu0 0.0
      %1512 = vmatpush1.msra.mxu0 0.0
      %1513 = vmatprep.subr.mxu0 0.0
      %1514 = vmatpush1.msra.mxu0 0.0
      %1515 = vmatprep.subr.mxu0 0.0
      %1516 = vmatpush1.msra.mxu0 0.0
      %1517 = vmatprep.subr.mxu0 0.0
      %1518 = vmatpush1.msra.mxu0 0.0
      %1519 = vmatprep.subr.mxu0 0.0
      %1520 = vmatpush1.msra.mxu0 0.0
      %1521 = vmatprep.subr.mxu0 0.0
      %1522 = vmatpush1.msra.mxu0 0.0
      %1523 = vmatprep.subr.mxu0 0.0
      %1524 = vmatpush1.msra.mxu0 0.0
      %1525 = vmatprep.subr.mxu0 0.0
      %1526 = vmatpush1.msra.mxu0 0.0
      %1527 = vmatprep.subr.mxu0 0.0
      %1528 = vmatpush1.msra.mxu0 0.0
      %1529 = vmatprep.subr.mxu0 0.0
      %1530 = vmatpush1.msra.mxu0 0.0
      %1531 = vmatprep.subr.mxu0 0.0
      %1532 = vmatpush1.msra.mxu0 0.0
      %1533 = vmatprep.subr.mxu0 0.0
      %1534 = vmatpush1.msra.mxu0 0.0
      %1535 = vmatprep.subr.mxu0 0.0
      %1536 = vmatpush1.msra.mxu0 0.0
      %1537 = vmatprep.subr.mxu0 0.0
      %1538 = vmatpush1.msra.mxu0 0.0
      %1539 = vmatprep.subr.mxu0 0.0
      %1540 = vmatpush1.msra.mxu0 0.0
      %1541 = vmatprep.subr.mxu0 0.0
      %1542 = vmatpush1.msra.mxu0 0.0
      %1543 = vmatprep.subr.mxu0 0.0
      %1544 = vmatpush1.msra.mxu0 0.0
      %1545 = vmatprep.mubr.f32.mxu0 0.0
      %1546 = vmatmul.mubr.f32.gmra.mrb[0].mxu0 %v1476
      %v1547 = vpop.f32.mrb[0].mxu0
      %v1548 = vadd.f32 0.0, %v1547
      %v1549 = vpop.f32.mrb[0].mxu0
      %v1550 = vadd.f32 0.0, %v1549
      %1551 = vmatprep.mubr.f32.mxu0 0.0
      %1552 = vmatmul.mubr.f32.gmra.mrb[0].mxu0 %v1479
      %v1553 = vpop.f32.mrb[0].mxu0
      %v1554 = vadd.f32 0.0, %v1553
      %v1555 = vpop.f32.mrb[0].mxu0
      %v1556 = vadd.f32 0.0, %v1555
      %1557 = vdwg.mxu0
      %v1558 = vmul.f32 %v1465, %v1465
      %v1559 = vmul.f32 %v1467, %v1467
      %v1560 = vmul.f32 %v1471, %v1471
      %v1561 = vmul.f32 %v1473, %v1473
      %v1562 = vsub.f32 %v1548, %v1558
      %v1563 = vsub.f32 %v1550, %v1559
      %v1564 = vsub.f32 %v1554, %v1560
      %v1565 = vsub.f32 %v1556, %v1561
      %v1566 = vadd.f32 %v1562, 1e-05
      %v1567 = vadd.f32 %v1563, 1e-05
      %v1568 = vadd.f32 %v1564, 1e-05
      %v1569 = vadd.f32 %v1565, 1e-05
      %v1570 = vrsqrt.pop %v1566
      %v1571 = vrsqrt.pop %v1567
      %v1572 = vrsqrt.pop %v1568
      %v1573 = vrsqrt.pop %v1569
      %v1574 = vsub.f32 %v1199, %v1465
      %v1575 = vsub.f32 %v1200, %v1467
      %v1576 = vsub.f32 %v1201, %v1471
      %v1577 = vsub.f32 %v1202, %v1473
      %v1578 = vmul.f32 %v1574, %v1570
      %v1579 = vmul.f32 %v1575, %v1571
      %v1580 = vmul.f32 %v1576, %v1572
      %v1581 = vmul.f32 %v1577, %v1573
      %v1582 = vld [vmem:[%s7] sm:$0x3]
      %v1584 = vlaneseq
      %v1585 = vshrl.u32 %v1584, 7
      %v1586 = vsub.s32 0, %v1585
      %v1587 = vrot.slane %v1582, %v1586
      %v1588 = vlaneseq
      %v1589 = vshrl.u32 %v1588, 7
      %v1590 = vsub.s32 1, %v1589
      %v1591 = vrot.slane %v1582, %v1590
      %v1594 = vmul.f32 %v1578, %v1587
      %v1595 = vmul.f32 %v1579, %v1591
      %v1596 = vmul.f32 %v1580, %v1587
      %v1597 = vmul.f32 %v1581, %v1591
      %v1598 = vld [vmem:[%s8] sm:$0x3]
      %v1600 = vlaneseq
      %v1601 = vshrl.u32 %v1600, 7
      %v1602 = vsub.s32 0, %v1601
      %v1603 = vrot.slane %v1598, %v1602
      %v1604 = vlaneseq
      %v1605 = vshrl.u32 %v1604, 7
      %v1606 = vsub.s32 1, %v1605
      %v1607 = vrot.slane %v1598, %v1606
      %v1610 = vadd.f32 %v1594, %v1603
      %v1611 = vadd.f32 %v1595, %v1607
      %v1612 = vadd.f32 %v1596, %v1603
      %v1613 = vadd.f32 %v1597, %v1607
      %1614 = vst [vmem:[%s406] sm:$0xff] %v1610
      %1615 = vst [vmem:[%s406 + $0x8] sm:$0xff] %v1611
      %1616 = vst [vmem:[%s406 + $0x10] sm:$0xff] %v1612
      %1617 = vst [vmem:[%s406 + $0x18] sm:$0xff] %v1613
      %p1618 = scmp.lt.s32.totalorder %s22, 1
      %s1619 = scalar_select %p1618, %s22, 1
      %s1620 = smul.addr %s1619, 4
      %s1621 = smul.addr %s1620, 8
      %s1622 = scalar_lea.vmem %s11, %s1621
      // Predicated region
      $region65: #{forward.1} parent=63 // pred_check
        %p1623 = pneg %p281
      $region66: #{forward.1} parent=63 // pred_check_branch
        %1625 = sbr.rel (%p1623) target = $region68
      $region67: #{forward.1} parent=63 // pred_region
        _
      $region68: #{forward.1} parent=63 // pred_fallthru
        _
    $region64: #{forward.1} parent=5 // pred_fallthru
      _
    %p1626 = scmp.le.s32.totalorder 2, %s17
    // Predicated region
    $region69: #{forward.1} parent=5 // pred_check
      %p1627 = pneg %p1626
    $region70: #{forward.1} parent=5 // pred_check_branch
      %1629 = sbr.rel (%p1627) target = $region72
    $region71: #{forward.1} parent=5 // pred_region
      %s1630 = ssub.s32 %s17, 2
      // Predicated region
      $region73: #{forward.1} parent=71 // pred_check
        %p1631 = pneg %p287
      $region74: #{forward.1} parent=71 // pred_check_branch
        %1633 = sbr.rel (%p1631) target = $region76
      $region75: #{forward.1} parent=71 // pred_region
        %p1634 = scmp.lt.s32.totalorder %s23, 1
        %s1635 = scalar_select %p1634, %s23, 1
        %s1636 = smul.addr %s1635, 4
        %s1637 = smul.addr %s1636, 8
        %s1638 = scalar_lea.vmem %s11, %s1637
      $region76: #{forward.1} parent=71 // pred_fallthru
        _
    $region72: #{forward.1} parent=5 // pred_fallthru
      _
  $region6: #{forward.1} parent=0 // loop_footer
    %s21 = sadd.s32 1, %s17
  $region7: #{forward.1} parent=0 // loop_footer_branch
    %16 = sbr.rel target = $region3
  $region8: #{forward.1} parent=0 // loop_exit
    _

</llo_original>
